<compile_context>
chip_gen: v5e
topology: v5e:2x2
jax: 0.10.0
libtpu: 0.0.40
codegen_flags: <defaults>
</compile_context>

<pallas_src>
import functools

import jax
import jax.numpy as jnp
import numpy as np
from jax.experimental import pallas as pl
from jax.experimental.pallas import tpu as pltpu


# ----------------------------- Pallas kernel ---------------------------------


def _split_heads(x2d, num_heads, head_dim):
    """(N, C) value -> (H, N, D) value via static lane slices + leading-axis concat.
    Pure register-level relayout: no VMEM scratch, no masked partial stores."""
    n = x2d.shape[0]
    return jnp.concatenate(
        [x2d[:, h * head_dim:(h + 1) * head_dim].reshape(1, n, head_dim)
         for h in range(num_heads)],
        axis=0)


def _merge_heads(x3d, num_heads):
    """(H, N, D) value -> (N, H*D) value via lane-axis concat (no scratch round trip)."""
    return jnp.concatenate([x3d[h] for h in range(num_heads)], axis=-1)


def _block_kernel(
    x_ref,                     # (1, L, C)  full token row; query tiles are sliced from it
    ln1g_ref, ln1b_ref,
    wq_ref, bq_ref,            # qk scale already folded into wq/bq
    wk_ref, bk_ref,
    wv_ref, bv_ref,
    wproj_ref, bproj_ref,
    ln2g_ref, ln2b_ref,
    wfc1_ref, bfc1_ref,
    wfc2_ref, bfc2_ref,
    out_ref,                   # (1, TL, C)
    k_scr,                     # (H, L, D) bf16  persists across token tiles of a batch row
    v_scr,                     # (H, L, D) bf16
    xn_scr,                    # (L, C)    bf16  cached LN1(x) for the whole row
    *, num_heads, tl, approx_softmax,
):
    f32 = jnp.float32
    bf16 = jnp.bfloat16
    eps = 1e-5

    C = x_ref.shape[-1]
    D = C // num_heads

    def layernorm(v, g_ref, b_ref):
        mu = jnp.mean(v, axis=-1, keepdims=True)
        var = jnp.mean((v - mu) ** 2, axis=-1, keepdims=True)
        return (v - mu) * jax.lax.rsqrt(var + eps) * g_ref[...] + b_ref[...]

    # ---- once per batch row: cache LN1(x) and build head-split K / V for the full sequence ----
    @pl.when(pl.program_id(1) == 0)
    def _():
        xf = x_ref[0].astype(f32)                                    # (L, C)
        xnf = layernorm(xf, ln1g_ref, ln1b_ref).astype(bf16)
        xn_scr[...] = xnf
        k = jnp.dot(xnf, wk_ref[...], preferred_element_type=f32) + bk_ref[...]
        v = jnp.dot(xnf, wv_ref[...], preferred_element_type=f32) + bv_ref[...]
        k_scr[...] = _split_heads(k.astype(bf16), num_heads, D)      # single full store
        v_scr[...] = _split_heads(v.astype(bf16), num_heads, D)

    # ---- query tile: slice of the single full-row input (no duplicate x DMA) ----
    start = pl.multiple_of(pl.program_id(1) * tl, tl)
    x = x_ref[0, pl.ds(start, tl), :].astype(f32)                    # (TL, C) residual stream
    xn = xn_scr[pl.ds(start, tl), :]                                 # (TL, C) bf16, LN1 reused
    q = jnp.dot(xn, wq_ref[...], preferred_element_type=f32) + bq_ref[...]  # scale pre-folded
    qh = _split_heads(q.astype(bf16), num_heads, D)                  # (H, TL, D)

    # ---- batched-heads attention (softmax statistics in f32) ----
    s = jnp.einsum('hld,hmd->hlm', qh, k_scr[...], preferred_element_type=f32)   # (H, TL, L)
    s = s - jnp.max(s, axis=-1, keepdims=True)
    p = jnp.exp(s)
    denom = jnp.sum(p, axis=-1, keepdims=True)
    if approx_softmax:
        p = p * pl.reciprocal(denom, approx=True)   # EUP vrcp (~1e-3 rel err), free slot
    else:
        p = p / denom
    o = jnp.einsum('hlm,hmd->hld', p.astype(bf16), v_scr[...], preferred_element_type=f32)

    # ---- head merge (lane concat, no scratch) + merged K=C output projection + residual ----
    attn = _merge_heads(o.astype(bf16), num_heads)                   # (TL, C) bf16
    x = x + jnp.dot(attn, wproj_ref[...], preferred_element_type=f32) + bproj_ref[...]

    # ---- LN2 + MLP (fc1 -> exact GELU -> fc2) + residual ----
    xn2 = layernorm(x, ln2g_ref, ln2b_ref).astype(bf16)
    h1 = jnp.dot(xn2, wfc1_ref[...], preferred_element_type=f32) + bfc1_ref[...]
    h1 = 0.5 * h1 * (1.0 + jax.lax.erf(h1 * 0.7071067811865476))     # exact GELU, f32
    h1 = h1.astype(bf16)
    x = x + jnp.dot(h1, wfc2_ref[...], preferred_element_type=f32) + bfc2_ref[...]

    out_ref[0] = x.astype(out_ref.dtype)


def _choose_tl(L, tl):
    """Token tile size. Whole-row for small / non-divisible L (typical LIT stages: 196, 49);
    otherwise the requested tile (sweep: 128 on v5e, 256 on v6e/v7x if VMEM permits)."""
    if tl is None:
        tl = 256
    tl = min(tl, L)
    if L % tl != 0 or (tl < L and tl % 8 != 0):
        # TODO(synk): pad/mask ragged token counts instead of the whole-row fallback.
        tl = L
    return tl


def _run_block(x, p, num_heads, tl=None, approx_softmax=True):
    """Apply one Block with a pallas_call; grid = (batch, token tiles).
    Note: the batch axis is the only 'parallel' axis; B >= 2 is needed to feed both
    TensorCores on v7x (the token-tile axis is coupled through the per-row K/V scratch)."""
    B, L, C = x.shape
    assert C % num_heads == 0
    hidden = p["wfc1"].shape[1]
    D = C // num_heads
    bf16 = jnp.bfloat16

    tl = _choose_tl(L, tl)
    n_tiles = L // tl

    kernel = functools.partial(
        _block_kernel, num_heads=num_heads, tl=tl, approx_softmax=approx_softmax)

    def wspec(shape):
        # Grid-invariant weight/bias block: stays VMEM-resident across all grid steps.
        # Buffered(1): single buffer (no pointless double-buffering of constant blocks).
        nd = len(shape)
        return pl.BlockSpec(shape, lambda b, i: (0,) * nd, pipeline_mode=pl.Buffered(1))

    # ---- derive the VMEM budget (weights single-buffered + activations + scratch + working set)
    itemsize = x.dtype.itemsize
    weight_bytes = sum(int(np.prod(w.shape)) * w.dtype.itemsize for w in p.values())
    act_bytes = 2 * L * C * itemsize + 2 * tl * C * itemsize          # x row + out tile (dbl buf)
    scratch_bytes = (2 * num_heads * L * D + L * C) * 2               # bf16 K, V, LN1 cache
    interm_bytes = (2 * num_heads * tl * L * 4                        # f32 score block (s, p)
                    + tl * hidden * 4 + 8 * tl * C * 4)               # fc1 act + misc working set
    vmem_limit = int(1.25 * (weight_bytes + act_bytes + scratch_bytes + interm_bytes))
    vmem_limit = min(max(vmem_limit, 32 * 1024 * 1024), 112 * 1024 * 1024)

    grid_spec = pltpu.PrefetchScalarGridSpec(
        num_scalar_prefetch=0,
        grid=(B, n_tiles),
        in_specs=[
            pl.BlockSpec((1, L, C), lambda b, i: (b, 0, 0)),   # single x input: full token row
            wspec((1, C)), wspec((1, C)),                      # ln1 gamma/beta
            wspec((C, C)), wspec((1, C)),                      # wq (scale folded), bq
            wspec((C, C)), wspec((1, C)),                      # wk, bk
            wspec((C, C)), wspec((1, C)),                      # wv, bv
            wspec((C, C)), wspec((1, C)),                      # wproj, bproj
            wspec((1, C)), wspec((1, C)),                      # ln2 gamma/beta
            wspec((C, hidden)), wspec((1, hidden)),            # wfc1, bfc1
            wspec((hidden, C)), wspec((1, C)),                 # wfc2, bfc2
        ],
        out_specs=pl.BlockSpec((1, tl, C), lambda b, i: (b, i, 0)),
        scratch_shapes=[
            pltpu.VMEM((num_heads, L, D), bf16),    # K (head-split), reused across token tiles
            pltpu.VMEM((num_heads, L, D), bf16),    # V (head-split)
            pltpu.VMEM((L, C), bf16),               # cached LN1(x) for the whole row
        ],
    )

    return pl.pallas_call(
        kernel,
        out_shape=jax.ShapeDtypeStruct((B, L, C), x.dtype),
        grid_spec=grid_spec,
        compiler_params=pltpu.CompilerParams(
            dimension_semantics=("parallel", "arbitrary"),
            vmem_limit_bytes=vmem_limit,
        ),
    )(
        x,
        p["ln1_g"], p["ln1_b"],
        p["wq"], p["bq"], p["wk"], p["bk"], p["wv"], p["bv"],
        p["wproj"], p["bproj"],
        p["ln2_g"], p["ln2_b"],
        p["wfc1"], p["bfc1"],
        p["wfc2"], p["bfc2"],
    )


def lit_layer_forward(x, prepared_blocks, num_heads, tl=None, approx_softmax=True):
    """LITLayer.forward: sequential blocks, no downsample."""
    for p in prepared_blocks:
        x = _run_block(x, p, num_heads, tl=tl, approx_softmax=approx_softmax)
    return x


# -------------------------- parameter initialization --------------------------


def init_block_params(key, dim, mlp_ratio):
    """Raw (PyTorch-equivalent) f32 parameters: y = x @ W + b (W already transposed)."""
    hidden = int(dim * mlp_ratio)
    ks = jax.random.split(key, 10)
    s = 0.02
    f32 = jnp.float32
    return {
        "ln1_g": 1.0 + 0.1 * jax.random.normal(ks[0], (1, dim), f32),
        "ln1_b": 0.1 * jax.random.normal(ks[1], (1, dim), f32),
        "wqkv": s * jax.random.normal(ks[2], (dim, 3 * dim), f32),
        "bqkv": s * jax.random.normal(ks[3], (1, 3 * dim), f32),
        "wproj": s * jax.random.normal(ks[4], (dim, dim), f32),
        "bproj": s * jax.random.normal(ks[5], (1, dim), f32),
        "ln2_g": 1.0 + 0.1 * jax.random.normal(ks[6], (1, dim), f32),
        "ln2_b": 0.1 * jax.random.normal(ks[7], (1, dim), f32),
        "wfc1": s * jax.random.normal(ks[8], (dim, hidden), f32),
        "bfc1": jnp.zeros((1, hidden), f32),
        "wfc2": s * jax.random.normal(ks[9], (hidden, dim), f32),
        "bfc2": jnp.zeros((1, dim), f32),
    }


def prepare_block_params(p, num_heads):
    """Split the fused QKV, fold the qk scale into the Q projection, pre-cast matmul weights
    to bf16 (halves weight HBM->VMEM DMA; MXU accumulates in f32). Done once, outside kernels."""
    C = p["wqkv"].shape[0]
    D = C // num_heads
    scale = D ** -0.5
    bf16 = jnp.bfloat16
    return {
        "ln1_g": p["ln1_g"], "ln1_b": p["ln1_b"],
        "wq": (p["wqkv"][:, 0 * C:1 * C] * scale).astype(bf16),
        "bq": p["bqkv"][:, 0 * C:1 * C] * scale,
        "wk": p["wqkv"][:, 1 * C:2 * C].astype(bf16),
        "bk": p["bqkv"][:, 1 * C:2 * C],
        "wv": p["wqkv"][:, 2 * C:3 * C].astype(bf16),
        "bv": p["bqkv"][:, 2 * C:3 * C],
        "wproj": p["wproj"].astype(bf16), "bproj": p["bproj"],
        "ln2_g": p["ln2_g"], "ln2_b": p["ln2_b"],
        "wfc1": p["wfc1"].astype(bf16), "bfc1": p["bfc1"],
        "wfc2": p["wfc2"].astype(bf16), "bfc2": p["bfc2"],
    }


# ------------------------------ pure-JAX reference ----------------------------


def _ref_block(x, p, num_heads):
    B, L, C = x.shape
    D = C // num_heads
    scale = D ** -0.5
    eps = 1e-5

    def ln(v, g, b):
        mu = jnp.mean(v, -1, keepdims=True)
        var = jnp.mean((v - mu) ** 2, -1, keepdims=True)
        return (v - mu) / jnp.sqrt(var + eps) * g + b

    xn = ln(x, p["ln1_g"][0], p["ln1_b"][0])
    qkv = xn @ p["wqkv"] + p["bqkv"][0]
    q, k, v = jnp.split(qkv, 3, axis=-1)
    q = q.reshape(B, L, num_heads, D).transpose(0, 2, 1, 3) * scale
    k = k.reshape(B, L, num_heads, D).transpose(0, 2, 1, 3)
    v = v.reshape(B, L, num_heads, D).transpose(0, 2, 1, 3)
    a = jax.nn.softmax(q @ k.transpose(0, 1, 3, 2), axis=-1)
    o = (a @ v).transpose(0, 2, 1, 3).reshape(B, L, C)
    x = x + (o @ p["wproj"] + p["bproj"][0])

    xn2 = ln(x, p["ln2_g"][0], p["ln2_b"][0])
    h = xn2 @ p["wfc1"] + p["bfc1"][0]
    h = 0.5 * h * (1.0 + jax.lax.erf(h / jnp.sqrt(2.0)))
    return x + (h @ p["wfc2"] + p["bfc2"][0])


def lit_layer_ref(x, blocks_params, num_heads):
    for p in blocks_params:
        x = _ref_block(x, p, num_heads)
    return x


# ----------------------------------- main -------------------------------------

if __name__ == "__main__":
    # Small config consistent with LITLayer(dim, input_resolution, depth, num_heads, mlp_ratio)
    B = 2
    H = W = 8
    L = H * W            # input_resolution = (8, 8)
    dim = 32
    depth = 2
    num_heads = 4
    mlp_ratio = 4.0

    key = jax.random.PRNGKey(0)
    kx, *kblocks = jax.random.split(key, depth + 1)
    x = jax.random.normal(kx, (B, L, dim), jnp.float32)
    raw_params = [init_block_params(kb, dim, mlp_ratio) for kb in kblocks]
    prepared = [prepare_block_params(p, num_heads) for p in raw_params]

    # tl=32 -> 2 token tiles per batch row: exercises both the K/V+LN1-build step (i == 0)
    # and the scratch-reuse step (i > 0).
    fwd = jax.jit(functools.partial(lit_layer_forward, num_heads=num_heads, tl=32))
    out = jax.block_until_ready(fwd(x, prepared))

    ref = jax.block_until_ready(lit_layer_ref(x, raw_params, num_heads))
    np.testing.assert_allclose(np.asarray(out), np.asarray(ref), rtol=2e-2, atol=2e-2)

    print("KERNEL_OK")
</pallas_src>

<mosaic_0001>
module attributes {stable_mosaic.version = 11 : i64} {
  func.func @_block_kernel(%arg0: i32, %arg1: i32, %arg2: memref<1x64x32xf32, #tpu.memory_space<vmem>>, %arg3: memref<1x32xf32, #tpu.memory_space<vmem>>, %arg4: memref<1x32xf32, #tpu.memory_space<vmem>>, %arg5: memref<32x32xbf16, #tpu.memory_space<vmem>>, %arg6: memref<1x32xf32, #tpu.memory_space<vmem>>, %arg7: memref<32x32xbf16, #tpu.memory_space<vmem>>, %arg8: memref<1x32xf32, #tpu.memory_space<vmem>>, %arg9: memref<32x32xbf16, #tpu.memory_space<vmem>>, %arg10: memref<1x32xf32, #tpu.memory_space<vmem>>, %arg11: memref<32x32xbf16, #tpu.memory_space<vmem>>, %arg12: memref<1x32xf32, #tpu.memory_space<vmem>>, %arg13: memref<1x32xf32, #tpu.memory_space<vmem>>, %arg14: memref<1x32xf32, #tpu.memory_space<vmem>>, %arg15: memref<32x128xbf16, #tpu.memory_space<vmem>>, %arg16: memref<1x128xf32, #tpu.memory_space<vmem>>, %arg17: memref<128x32xbf16, #tpu.memory_space<vmem>>, %arg18: memref<1x32xf32, #tpu.memory_space<vmem>>, %arg19: memref<1x32x32xf32, #tpu.memory_space<vmem>>, %arg20: memref<4x64x8xbf16, #tpu.memory_space<vmem>>, %arg21: memref<4x64x8xbf16, #tpu.memory_space<vmem>>, %arg22: memref<64x32xbf16, #tpu.memory_space<vmem>>) attributes {dimension_semantics = [#tpu.dimension_semantics<parallel>, #tpu.dimension_semantics<arbitrary>], iteration_bounds = array<i64: 2, 2>, scalar_prefetch = 0 : i64, scratch_operands = 3 : i64, tpu.core_type = #tpu.core_type<tc>, window_params = [{transform_indices = @transform_0, window_bounds = array<i64: 1, 64, 32>}, {pipeline_mode = #tpu.pipeline_mode<synchronous>, transform_indices = @transform_1, window_bounds = array<i64: 1, 32>}, {pipeline_mode = #tpu.pipeline_mode<synchronous>, transform_indices = @transform_2, window_bounds = array<i64: 1, 32>}, {pipeline_mode = #tpu.pipeline_mode<synchronous>, transform_indices = @transform_3, window_bounds = array<i64: 32, 32>}, {pipeline_mode = #tpu.pipeline_mode<synchronous>, transform_indices = @transform_4, window_bounds = array<i64: 1, 32>}, {pipeline_mode = #tpu.pipeline_mode<synchronous>, transform_indices = @transform_5, window_bounds = array<i64: 32, 32>}, {pipeline_mode = #tpu.pipeline_mode<synchronous>, transform_indices = @transform_6, window_bounds = array<i64: 1, 32>}, {pipeline_mode = #tpu.pipeline_mode<synchronous>, transform_indices = @transform_7, window_bounds = array<i64: 32, 32>}, {pipeline_mode = #tpu.pipeline_mode<synchronous>, transform_indices = @transform_8, window_bounds = array<i64: 1, 32>}, {pipeline_mode = #tpu.pipeline_mode<synchronous>, transform_indices = @transform_9, window_bounds = array<i64: 32, 32>}, {pipeline_mode = #tpu.pipeline_mode<synchronous>, transform_indices = @transform_10, window_bounds = array<i64: 1, 32>}, {pipeline_mode = #tpu.pipeline_mode<synchronous>, transform_indices = @transform_11, window_bounds = array<i64: 1, 32>}, {pipeline_mode = #tpu.pipeline_mode<synchronous>, transform_indices = @transform_12, window_bounds = array<i64: 1, 32>}, {pipeline_mode = #tpu.pipeline_mode<synchronous>, transform_indices = @transform_13, window_bounds = array<i64: 32, 128>}, {pipeline_mode = #tpu.pipeline_mode<synchronous>, transform_indices = @transform_14, window_bounds = array<i64: 1, 128>}, {pipeline_mode = #tpu.pipeline_mode<synchronous>, transform_indices = @transform_15, window_bounds = array<i64: 128, 32>}, {pipeline_mode = #tpu.pipeline_mode<synchronous>, transform_indices = @transform_16, window_bounds = array<i64: 1, 32>}, {transform_indices = @transform_17, window_bounds = array<i64: 1, 32, 32>}]} {
    %c0_i32 = arith.constant 0 : i32
    %0 = arith.cmpi eq, %arg1, %c0_i32 : i32
    %1 = arith.extui %0 : i1 to i32
    %c0_i32_0 = arith.constant 0 : i32
    %2 = arith.cmpi ne, %1, %c0_i32_0 : i32
    scf.if %2 {
      %c0_47 = arith.constant 0 : index
      %c0_48 = arith.constant 0 : index
      %c0_49 = arith.constant 0 : index
      %104 = vector.load %arg2[%c0_47, %c0_48, %c0_49] : memref<1x64x32xf32, #tpu.memory_space<vmem>>, vector<1x64x32xf32>
      %105 = vector.shape_cast %104 : vector<1x64x32xf32> to vector<64x32xf32>
      %cst_50 = arith.constant dense<0.000000e+00> : vector<64xf32>
      %106 = vector.multi_reduction <add>, %105, %cst_50 [1] : vector<64x32xf32> to vector<64xf32>
      %107 = vector.shape_cast %106 : vector<64xf32> to vector<64x1xf32>
      %cst_51 = arith.constant 3.200000e+01 : f32
      %108 = vector.broadcast %cst_51 : f32 to vector<64x1xf32>
      %109 = arith.divf %107, %108 : vector<64x1xf32>
      %110 = vector.broadcast %109 : vector<64x1xf32> to vector<64x32xf32>
      %111 = arith.subf %105, %110 : vector<64x32xf32>
      %112 = arith.mulf %111, %111 : vector<64x32xf32>
      %cst_52 = arith.constant dense<0.000000e+00> : vector<64xf32>
      %113 = vector.multi_reduction <add>, %112, %cst_52 [1] : vector<64x32xf32> to vector<64xf32>
      %114 = vector.shape_cast %113 : vector<64xf32> to vector<64x1xf32>
      %cst_53 = arith.constant 3.200000e+01 : f32
      %115 = vector.broadcast %cst_53 : f32 to vector<64x1xf32>
      %116 = arith.divf %114, %115 : vector<64x1xf32>
      %117 = vector.broadcast %109 : vector<64x1xf32> to vector<64x32xf32>
      %118 = arith.subf %105, %117 : vector<64x32xf32>
      %cst_54 = arith.constant 9.99999974E-6 : f32
      %119 = vector.broadcast %cst_54 : f32 to vector<64x1xf32>
      %120 = arith.addf %116, %119 : vector<64x1xf32>
      %121 = math.rsqrt %120 : vector<64x1xf32>
      %122 = vector.broadcast %121 : vector<64x1xf32> to vector<64x32xf32>
      %123 = arith.mulf %118, %122 : vector<64x32xf32>
      %c0_55 = arith.constant 0 : index
      %c0_56 = arith.constant 0 : index
      %124 = vector.load %arg3[%c0_55, %c0_56] : memref<1x32xf32, #tpu.memory_space<vmem>>, vector<1x32xf32>
      %125 = vector.broadcast %124 : vector<1x32xf32> to vector<64x32xf32>
      %126 = arith.mulf %123, %125 : vector<64x32xf32>
      %c0_57 = arith.constant 0 : index
      %c0_58 = arith.constant 0 : index
      %127 = vector.load %arg4[%c0_57, %c0_58] : memref<1x32xf32, #tpu.memory_space<vmem>>, vector<1x32xf32>
      %128 = vector.broadcast %127 : vector<1x32xf32> to vector<64x32xf32>
      %129 = arith.addf %126, %128 : vector<64x32xf32>
      %130 = arith.truncf %129 : vector<64x32xf32> to vector<64x32xbf16>
      %c0_59 = arith.constant 0 : index
      %c0_60 = arith.constant 0 : index
      %131 = vector.load %arg22[%c0_59, %c0_60] : memref<64x32xbf16, #tpu.memory_space<vmem>>, vector<64x32xbf16>
      tpu.vector_store %arg22[%c0_59, %c0_60], %130 {strides = array<i32>} : memref<64x32xbf16, #tpu.memory_space<vmem>>, vector<64x32xbf16>,
      %c0_61 = arith.constant 0 : index
      %c0_62 = arith.constant 0 : index
      %132 = vector.load %arg7[%c0_61, %c0_62] : memref<32x32xbf16, #tpu.memory_space<vmem>>, vector<32x32xbf16>
      %cst_63 = arith.constant dense<0.000000e+00> : vector<64x32xf32>
      %133 = tpu.matmul %130, %132, %cst_63 {dimension_numbers = #tpu.dot_dimension_numbers<[1], [0], [0], [1], [0, 0, 1, 1], [], []>} : vector<64x32xbf16>, vector<32x32xbf16>, vector<64x32xf32> -> vector<64x32xf32>
      %c0_64 = arith.constant 0 : index
      %c0_65 = arith.constant 0 : index
      %134 = vector.load %arg8[%c0_64, %c0_65] : memref<1x32xf32, #tpu.memory_space<vmem>>, vector<1x32xf32>
      %135 = vector.broadcast %134 : vector<1x32xf32> to vector<64x32xf32>
      %136 = arith.addf %133, %135 : vector<64x32xf32>
      %c0_66 = arith.constant 0 : index
      %c0_67 = arith.constant 0 : index
      %137 = vector.load %arg9[%c0_66, %c0_67] : memref<32x32xbf16, #tpu.memory_space<vmem>>, vector<32x32xbf16>
      %cst_68 = arith.constant dense<0.000000e+00> : vector<64x32xf32>
      %138 = tpu.matmul %130, %137, %cst_68 {dimension_numbers = #tpu.dot_dimension_numbers<[1], [0], [0], [1], [0, 0, 1, 1], [], []>} : vector<64x32xbf16>, vector<32x32xbf16>, vector<64x32xf32> -> vector<64x32xf32>
      %c0_69 = arith.constant 0 : index
      %c0_70 = arith.constant 0 : index
      %139 = vector.load %arg10[%c0_69, %c0_70] : memref<1x32xf32, #tpu.memory_space<vmem>>, vector<1x32xf32>
      %140 = vector.broadcast %139 : vector<1x32xf32> to vector<64x32xf32>
      %141 = arith.addf %138, %140 : vector<64x32xf32>
      %142 = arith.truncf %136 : vector<64x32xf32> to vector<64x32xbf16>
      %143 = vector.extract_strided_slice %142 {offsets = [0, 0], sizes = [64, 8], strides = [1, 1]} : vector<64x32xbf16> to vector<64x8xbf16>
      %144 = vector.shape_cast %143 : vector<64x8xbf16> to vector<1x64x8xbf16>
      %145 = vector.extract_strided_slice %142 {offsets = [0, 8], sizes = [64, 8], strides = [1, 1]} : vector<64x32xbf16> to vector<64x8xbf16>
      %146 = vector.shape_cast %145 : vector<64x8xbf16> to vector<1x64x8xbf16>
      %147 = vector.extract_strided_slice %142 {offsets = [0, 16], sizes = [64, 8], strides = [1, 1]} : vector<64x32xbf16> to vector<64x8xbf16>
      %148 = vector.shape_cast %147 : vector<64x8xbf16> to vector<1x64x8xbf16>
      %149 = vector.extract_strided_slice %142 {offsets = [0, 24], sizes = [64, 8], strides = [1, 1]} : vector<64x32xbf16> to vector<64x8xbf16>
      %150 = vector.shape_cast %149 : vector<64x8xbf16> to vector<1x64x8xbf16>
      %151 = tpu.concatenate %144, %146, %148, %150 in 0 : vector<1x64x8xbf16>, vector<1x64x8xbf16>, vector<1x64x8xbf16>, vector<1x64x8xbf16> -> vector<4x64x8xbf16>
      %c0_71 = arith.constant 0 : index
      %c0_72 = arith.constant 0 : index
      %c0_73 = arith.constant 0 : index
      %152 = vector.load %arg20[%c0_71, %c0_72, %c0_73] : memref<4x64x8xbf16, #tpu.memory_space<vmem>>, vector<4x64x8xbf16>
      tpu.vector_store %arg20[%c0_71, %c0_72, %c0_73], %151 {strides = array<i32>} : memref<4x64x8xbf16, #tpu.memory_space<vmem>>, vector<4x64x8xbf16>,
      %153 = arith.truncf %141 : vector<64x32xf32> to vector<64x32xbf16>
      %154 = vector.extract_strided_slice %153 {offsets = [0, 0], sizes = [64, 8], strides = [1, 1]} : vector<64x32xbf16> to vector<64x8xbf16>
      %155 = vector.shape_cast %154 : vector<64x8xbf16> to vector<1x64x8xbf16>
      %156 = vector.extract_strided_slice %153 {offsets = [0, 8], sizes = [64, 8], strides = [1, 1]} : vector<64x32xbf16> to vector<64x8xbf16>
      %157 = vector.shape_cast %156 : vector<64x8xbf16> to vector<1x64x8xbf16>
      %158 = vector.extract_strided_slice %153 {offsets = [0, 16], sizes = [64, 8], strides = [1, 1]} : vector<64x32xbf16> to vector<64x8xbf16>
      %159 = vector.shape_cast %158 : vector<64x8xbf16> to vector<1x64x8xbf16>
      %160 = vector.extract_strided_slice %153 {offsets = [0, 24], sizes = [64, 8], strides = [1, 1]} : vector<64x32xbf16> to vector<64x8xbf16>
      %161 = vector.shape_cast %160 : vector<64x8xbf16> to vector<1x64x8xbf16>
      %162 = tpu.concatenate %155, %157, %159, %161 in 0 : vector<1x64x8xbf16>, vector<1x64x8xbf16>, vector<1x64x8xbf16>, vector<1x64x8xbf16> -> vector<4x64x8xbf16>
      %c0_74 = arith.constant 0 : index
      %c0_75 = arith.constant 0 : index
      %c0_76 = arith.constant 0 : index
      %163 = vector.load %arg21[%c0_74, %c0_75, %c0_76] : memref<4x64x8xbf16, #tpu.memory_space<vmem>>, vector<4x64x8xbf16>
      tpu.vector_store %arg21[%c0_74, %c0_75, %c0_76], %162 {strides = array<i32>} : memref<4x64x8xbf16, #tpu.memory_space<vmem>>, vector<4x64x8xbf16>,
    } else {
    }
    %c32_i32 = arith.constant 32 : i32
    %3 = arith.muli %arg1, %c32_i32 : i32
    %4 = tpu.assume_multiple %3, 32 : i32
    %c0 = arith.constant 0 : index
    %5 = arith.index_cast %4 : i32 to index
    %c0_1 = arith.constant 0 : index
    %6 = vector.load %arg2[%c0, %5, %c0_1] : memref<1x64x32xf32, #tpu.memory_space<vmem>>, vector<1x32x32xf32>
    %7 = vector.shape_cast %6 : vector<1x32x32xf32> to vector<32x32xf32>
    %8 = arith.index_cast %4 : i32 to index
    %c0_2 = arith.constant 0 : index
    %9 = vector.load %arg22[%8, %c0_2] : memref<64x32xbf16, #tpu.memory_space<vmem>>, vector<32x32xbf16>
    %c0_3 = arith.constant 0 : index
    %c0_4 = arith.constant 0 : index
    %10 = vector.load %arg5[%c0_3, %c0_4] : memref<32x32xbf16, #tpu.memory_space<vmem>>, vector<32x32xbf16>
    %cst = arith.constant dense<0.000000e+00> : vector<32x32xf32>
    %11 = tpu.matmul %9, %10, %cst {dimension_numbers = #tpu.dot_dimension_numbers<[1], [0], [0], [1], [0, 0, 1, 1], [], []>} : vector<32x32xbf16>, vector<32x32xbf16>, vector<32x32xf32> -> vector<32x32xf32>
    %c0_5 = arith.constant 0 : index
    %c0_6 = arith.constant 0 : index
    %12 = vector.load %arg6[%c0_5, %c0_6] : memref<1x32xf32, #tpu.memory_space<vmem>>, vector<1x32xf32>
    %13 = vector.broadcast %12 : vector<1x32xf32> to vector<32x32xf32>
    %14 = arith.addf %11, %13 : vector<32x32xf32>
    %15 = arith.truncf %14 : vector<32x32xf32> to vector<32x32xbf16>
    %16 = vector.extract_strided_slice %15 {offsets = [0, 0], sizes = [32, 8], strides = [1, 1]} : vector<32x32xbf16> to vector<32x8xbf16>
    %17 = vector.shape_cast %16 : vector<32x8xbf16> to vector<1x32x8xbf16>
    %18 = vector.extract_strided_slice %15 {offsets = [0, 8], sizes = [32, 8], strides = [1, 1]} : vector<32x32xbf16> to vector<32x8xbf16>
    %19 = vector.shape_cast %18 : vector<32x8xbf16> to vector<1x32x8xbf16>
    %20 = vector.extract_strided_slice %15 {offsets = [0, 16], sizes = [32, 8], strides = [1, 1]} : vector<32x32xbf16> to vector<32x8xbf16>
    %21 = vector.shape_cast %20 : vector<32x8xbf16> to vector<1x32x8xbf16>
    %22 = vector.extract_strided_slice %15 {offsets = [0, 24], sizes = [32, 8], strides = [1, 1]} : vector<32x32xbf16> to vector<32x8xbf16>
    %23 = vector.shape_cast %22 : vector<32x8xbf16> to vector<1x32x8xbf16>
    %24 = tpu.concatenate %17, %19, %21, %23 in 0 : vector<1x32x8xbf16>, vector<1x32x8xbf16>, vector<1x32x8xbf16>, vector<1x32x8xbf16> -> vector<4x32x8xbf16>
    %c0_7 = arith.constant 0 : index
    %c0_8 = arith.constant 0 : index
    %c0_9 = arith.constant 0 : index
    %25 = vector.load %arg20[%c0_7, %c0_8, %c0_9] : memref<4x64x8xbf16, #tpu.memory_space<vmem>>, vector<4x64x8xbf16>
    "tpu.trace_start"() <{level = 10 : i32, message = "hld,hmd->hlm"}> : () -> ()
    %cst_10 = arith.constant dense<0.000000e+00> : vector<4x32x64xf32>
    %26 = tpu.matmul %24, %25, %cst_10 {dimension_numbers = #tpu.dot_dimension_numbers<[2], [2], [1], [1], [0, 0, 0, 1, 1, 1], [0], [0]>} : vector<4x32x8xbf16>, vector<4x64x8xbf16>, vector<4x32x64xf32> -> vector<4x32x64xf32>
    "tpu.trace_stop"() : () -> ()
    %cst_11 = arith.constant dense<0xFF800000> : vector<4x32xf32>
    %27 = vector.multi_reduction <maximumf>, %26, %cst_11 [2] : vector<4x32x64xf32> to vector<4x32xf32>
    %28 = vector.shape_cast %27 : vector<4x32xf32> to vector<4x32x1xf32>
    %29 = vector.broadcast %28 : vector<4x32x1xf32> to vector<4x32x64xf32>
    %30 = arith.subf %26, %29 : vector<4x32x64xf32>
    %31 = math.exp %30 : vector<4x32x64xf32>
    %cst_12 = arith.constant dense<0.000000e+00> : vector<4x32xf32>
    %32 = vector.multi_reduction <add>, %31, %cst_12 [2] : vector<4x32x64xf32> to vector<4x32xf32>
    %33 = vector.shape_cast %32 : vector<4x32xf32> to vector<4x32x1xf32>
    %34 = tpu.reciprocal %33 {approx = true} : vector<4x32x1xf32> -> vector<4x32x1xf32>
    %35 = vector.broadcast %34 : vector<4x32x1xf32> to vector<4x32x64xf32>
    %36 = arith.mulf %31, %35 : vector<4x32x64xf32>
    %37 = arith.truncf %36 : vector<4x32x64xf32> to vector<4x32x64xbf16>
    %c0_13 = arith.constant 0 : index
    %c0_14 = arith.constant 0 : index
    %c0_15 = arith.constant 0 : index
    %38 = vector.load %arg21[%c0_13, %c0_14, %c0_15] : memref<4x64x8xbf16, #tpu.memory_space<vmem>>, vector<4x64x8xbf16>
    "tpu.trace_start"() <{level = 10 : i32, message = "hlm,hmd->hld"}> : () -> ()
    %cst_16 = arith.constant dense<0.000000e+00> : vector<4x32x8xf32>
    %39 = tpu.matmul %37, %38, %cst_16 {dimension_numbers = #tpu.dot_dimension_numbers<[2], [1], [1], [2], [0, 0, 0, 1, 1, 2], [0], [0]>} : vector<4x32x64xbf16>, vector<4x64x8xbf16>, vector<4x32x8xf32> -> vector<4x32x8xf32>
    "tpu.trace_stop"() : () -> ()
    %40 = arith.truncf %39 : vector<4x32x8xf32> to vector<4x32x8xbf16>
    %41 = vector.extract_strided_slice %40 {offsets = [0, 0, 0], sizes = [1, 32, 8], strides = [1, 1, 1]} : vector<4x32x8xbf16> to vector<1x32x8xbf16>
    %42 = vector.shape_cast %41 : vector<1x32x8xbf16> to vector<32x8xbf16>
    %43 = vector.extract_strided_slice %40 {offsets = [1, 0, 0], sizes = [1, 32, 8], strides = [1, 1, 1]} : vector<4x32x8xbf16> to vector<1x32x8xbf16>
    %44 = vector.shape_cast %43 : vector<1x32x8xbf16> to vector<32x8xbf16>
    %45 = vector.extract_strided_slice %40 {offsets = [2, 0, 0], sizes = [1, 32, 8], strides = [1, 1, 1]} : vector<4x32x8xbf16> to vector<1x32x8xbf16>
    %46 = vector.shape_cast %45 : vector<1x32x8xbf16> to vector<32x8xbf16>
    %47 = vector.extract_strided_slice %40 {offsets = [3, 0, 0], sizes = [1, 32, 8], strides = [1, 1, 1]} : vector<4x32x8xbf16> to vector<1x32x8xbf16>
    %48 = vector.shape_cast %47 : vector<1x32x8xbf16> to vector<32x8xbf16>
    %49 = tpu.concatenate %42, %44, %46, %48 in 1 : vector<32x8xbf16>, vector<32x8xbf16>, vector<32x8xbf16>, vector<32x8xbf16> -> vector<32x32xbf16>
    %c0_17 = arith.constant 0 : index
    %c0_18 = arith.constant 0 : index
    %50 = vector.load %arg11[%c0_17, %c0_18] : memref<32x32xbf16, #tpu.memory_space<vmem>>, vector<32x32xbf16>
    %cst_19 = arith.constant dense<0.000000e+00> : vector<32x32xf32>
    %51 = tpu.matmul %49, %50, %cst_19 {dimension_numbers = #tpu.dot_dimension_numbers<[1], [0], [0], [1], [0, 0, 1, 1], [], []>} : vector<32x32xbf16>, vector<32x32xbf16>, vector<32x32xf32> -> vector<32x32xf32>
    %52 = arith.addf %7, %51 : vector<32x32xf32>
    %c0_20 = arith.constant 0 : index
    %c0_21 = arith.constant 0 : index
    %53 = vector.load %arg12[%c0_20, %c0_21] : memref<1x32xf32, #tpu.memory_space<vmem>>, vector<1x32xf32>
    %54 = vector.broadcast %53 : vector<1x32xf32> to vector<32x32xf32>
    %55 = arith.addf %52, %54 : vector<32x32xf32>
    %cst_22 = arith.constant dense<0.000000e+00> : vector<32xf32>
    %56 = vector.multi_reduction <add>, %55, %cst_22 [1] : vector<32x32xf32> to vector<32xf32>
    %57 = vector.shape_cast %56 : vector<32xf32> to vector<32x1xf32>
    %cst_23 = arith.constant 3.200000e+01 : f32
    %58 = vector.broadcast %cst_23 : f32 to vector<32x1xf32>
    %59 = arith.divf %57, %58 : vector<32x1xf32>
    %60 = vector.broadcast %59 : vector<32x1xf32> to vector<32x32xf32>
    %61 = arith.subf %55, %60 : vector<32x32xf32>
    %62 = arith.mulf %61, %61 : vector<32x32xf32>
    %cst_24 = arith.constant dense<0.000000e+00> : vector<32xf32>
    %63 = vector.multi_reduction <add>, %62, %cst_24 [1] : vector<32x32xf32> to vector<32xf32>
    %64 = vector.shape_cast %63 : vector<32xf32> to vector<32x1xf32>
    %cst_25 = arith.constant 3.200000e+01 : f32
    %65 = vector.broadcast %cst_25 : f32 to vector<32x1xf32>
    %66 = arith.divf %64, %65 : vector<32x1xf32>
    %67 = vector.broadcast %59 : vector<32x1xf32> to vector<32x32xf32>
    %68 = arith.subf %55, %67 : vector<32x32xf32>
    %cst_26 = arith.constant 9.99999974E-6 : f32
    %69 = vector.broadcast %cst_26 : f32 to vector<32x1xf32>
    %70 = arith.addf %66, %69 : vector<32x1xf32>
    %71 = math.rsqrt %70 : vector<32x1xf32>
    %72 = vector.broadcast %71 : vector<32x1xf32> to vector<32x32xf32>
    %73 = arith.mulf %68, %72 : vector<32x32xf32>
    %c0_27 = arith.constant 0 : index
    %c0_28 = arith.constant 0 : index
    %74 = vector.load %arg13[%c0_27, %c0_28] : memref<1x32xf32, #tpu.memory_space<vmem>>, vector<1x32xf32>
    %75 = vector.broadcast %74 : vector<1x32xf32> to vector<32x32xf32>
    %76 = arith.mulf %73, %75 : vector<32x32xf32>
    %c0_29 = arith.constant 0 : index
    %c0_30 = arith.constant 0 : index
    %77 = vector.load %arg14[%c0_29, %c0_30] : memref<1x32xf32, #tpu.memory_space<vmem>>, vector<1x32xf32>
    %78 = vector.broadcast %77 : vector<1x32xf32> to vector<32x32xf32>
    %79 = arith.addf %76, %78 : vector<32x32xf32>
    %80 = arith.truncf %79 : vector<32x32xf32> to vector<32x32xbf16>
    %c0_31 = arith.constant 0 : index
    %c0_32 = arith.constant 0 : index
    %81 = vector.load %arg15[%c0_31, %c0_32] : memref<32x128xbf16, #tpu.memory_space<vmem>>, vector<32x128xbf16>
    %cst_33 = arith.constant dense<0.000000e+00> : vector<32x128xf32>
    %82 = tpu.matmul %80, %81, %cst_33 {dimension_numbers = #tpu.dot_dimension_numbers<[1], [0], [0], [1], [0, 0, 1, 1], [], []>} : vector<32x32xbf16>, vector<32x128xbf16>, vector<32x128xf32> -> vector<32x128xf32>
    %c0_34 = arith.constant 0 : index
    %c0_35 = arith.constant 0 : index
    %83 = vector.load %arg16[%c0_34, %c0_35] : memref<1x128xf32, #tpu.memory_space<vmem>>, vector<1x128xf32>
    %84 = vector.broadcast %83 : vector<1x128xf32> to vector<32x128xf32>
    %85 = arith.addf %82, %84 : vector<32x128xf32>
    %cst_36 = arith.constant 5.000000e-01 : f32
    %86 = vector.broadcast %cst_36 : f32 to vector<32x128xf32>
    %87 = arith.mulf %86, %85 : vector<32x128xf32>
    %cst_37 = arith.constant 0.707106769 : f32
    %88 = vector.broadcast %cst_37 : f32 to vector<32x128xf32>
    %89 = arith.mulf %85, %88 : vector<32x128xf32>
    %90 = math.erf %89 : vector<32x128xf32>
    %cst_38 = arith.constant 1.000000e+00 : f32
    %91 = vector.broadcast %cst_38 : f32 to vector<32x128xf32>
    %92 = arith.addf %91, %90 : vector<32x128xf32>
    %93 = arith.mulf %87, %92 : vector<32x128xf32>
    %94 = arith.truncf %93 : vector<32x128xf32> to vector<32x128xbf16>
    %c0_39 = arith.constant 0 : index
    %c0_40 = arith.constant 0 : index
    %95 = vector.load %arg17[%c0_39, %c0_40] : memref<128x32xbf16, #tpu.memory_space<vmem>>, vector<128x32xbf16>
    %cst_41 = arith.constant dense<0.000000e+00> : vector<32x32xf32>
    %96 = tpu.matmul %94, %95, %cst_41 {dimension_numbers = #tpu.dot_dimension_numbers<[1], [0], [0], [1], [0, 0, 1, 1], [], []>} : vector<32x128xbf16>, vector<128x32xbf16>, vector<32x32xf32> -> vector<32x32xf32>
    %97 = arith.addf %55, %96 : vector<32x32xf32>
    %c0_42 = arith.constant 0 : index
    %c0_43 = arith.constant 0 : index
    %98 = vector.load %arg18[%c0_42, %c0_43] : memref<1x32xf32, #tpu.memory_space<vmem>>, vector<1x32xf32>
    %99 = vector.broadcast %98 : vector<1x32xf32> to vector<32x32xf32>
    %100 = arith.addf %97, %99 : vector<32x32xf32>
    %c0_44 = arith.constant 0 : index
    %c0_45 = arith.constant 0 : index
    %c0_46 = arith.constant 0 : index
    %101 = vector.load %arg19[%c0_44, %c0_45, %c0_46] : memref<1x32x32xf32, #tpu.memory_space<vmem>>, vector<1x32x32xf32>
    %102 = vector.shape_cast %101 : vector<1x32x32xf32> to vector<32x32xf32>
    %103 = vector.shape_cast %100 : vector<32x32xf32> to vector<1x32x32xf32>
    tpu.vector_store %arg19[%c0_44, %c0_45, %c0_46], %103 {strides = array<i32>} : memref<1x32x32xf32, #tpu.memory_space<vmem>>, vector<1x32x32xf32>,
    return
  }
  func.func @transform_0(%arg0: i32, %arg1: i32) -> (i32, i32, i32) {
    %c0_i32 = arith.constant 0 : i32
    %c0_i32_0 = arith.constant 0 : i32
    %c0_i32_1 = arith.constant 0 : i32
    return %arg0, %c0_i32, %c0_i32_0 : i32, i32, i32
  }
  func.func @transform_1(%arg0: i32, %arg1: i32) -> (i32, i32) {
    %c0_i32 = arith.constant 0 : i32
    %c0_i32_0 = arith.constant 0 : i32
    %c0_i32_1 = arith.constant 0 : i32
    return %c0_i32, %c0_i32_0 : i32, i32
  }
  func.func @transform_2(%arg0: i32, %arg1: i32) -> (i32, i32) {
    %c0_i32 = arith.constant 0 : i32
    %c0_i32_0 = arith.constant 0 : i32
    %c0_i32_1 = arith.constant 0 : i32
    return %c0_i32, %c0_i32_0 : i32, i32
  }
  func.func @transform_3(%arg0: i32, %arg1: i32) -> (i32, i32) {
    %c0_i32 = arith.constant 0 : i32
    %c0_i32_0 = arith.constant 0 : i32
    %c0_i32_1 = arith.constant 0 : i32
    return %c0_i32, %c0_i32_0 : i32, i32
  }
  func.func @transform_4(%arg0: i32, %arg1: i32) -> (i32, i32) {
    %c0_i32 = arith.constant 0 : i32
    %c0_i32_0 = arith.constant 0 : i32
    %c0_i32_1 = arith.constant 0 : i32
    return %c0_i32, %c0_i32_0 : i32, i32
  }
  func.func @transform_5(%arg0: i32, %arg1: i32) -> (i32, i32) {
    %c0_i32 = arith.constant 0 : i32
    %c0_i32_0 = arith.constant 0 : i32
    %c0_i32_1 = arith.constant 0 : i32
    return %c0_i32, %c0_i32_0 : i32, i32
  }
  func.func @transform_6(%arg0: i32, %arg1: i32) -> (i32, i32) {
    %c0_i32 = arith.constant 0 : i32
    %c0_i32_0 = arith.constant 0 : i32
    %c0_i32_1 = arith.constant 0 : i32
    return %c0_i32, %c0_i32_0 : i32, i32
  }
  func.func @transform_7(%arg0: i32, %arg1: i32) -> (i32, i32) {
    %c0_i32 = arith.constant 0 : i32
    %c0_i32_0 = arith.constant 0 : i32
    %c0_i32_1 = arith.constant 0 : i32
    return %c0_i32, %c0_i32_0 : i32, i32
  }
  func.func @transform_8(%arg0: i32, %arg1: i32) -> (i32, i32) {
    %c0_i32 = arith.constant 0 : i32
    %c0_i32_0 = arith.constant 0 : i32
    %c0_i32_1 = arith.constant 0 : i32
    return %c0_i32, %c0_i32_0 : i32, i32
  }
  func.func @transform_9(%arg0: i32, %arg1: i32) -> (i32, i32) {
    %c0_i32 = arith.constant 0 : i32
    %c0_i32_0 = arith.constant 0 : i32
    %c0_i32_1 = arith.constant 0 : i32
    return %c0_i32, %c0_i32_0 : i32, i32
  }
  func.func @transform_10(%arg0: i32, %arg1: i32) -> (i32, i32) {
    %c0_i32 = arith.constant 0 : i32
    %c0_i32_0 = arith.constant 0 : i32
    %c0_i32_1 = arith.constant 0 : i32
    return %c0_i32, %c0_i32_0 : i32, i32
  }
  func.func @transform_11(%arg0: i32, %arg1: i32) -> (i32, i32) {
    %c0_i32 = arith.constant 0 : i32
    %c0_i32_0 = arith.constant 0 : i32
    %c0_i32_1 = arith.constant 0 : i32
    return %c0_i32, %c0_i32_0 : i32, i32
  }
  func.func @transform_12(%arg0: i32, %arg1: i32) -> (i32, i32) {
    %c0_i32 = arith.constant 0 : i32
    %c0_i32_0 = arith.constant 0 : i32
    %c0_i32_1 = arith.constant 0 : i32
    return %c0_i32, %c0_i32_0 : i32, i32
  }
  func.func @transform_13(%arg0: i32, %arg1: i32) -> (i32, i32) {
    %c0_i32 = arith.constant 0 : i32
    %c0_i32_0 = arith.constant 0 : i32
    %c0_i32_1 = arith.constant 0 : i32
    return %c0_i32, %c0_i32_0 : i32, i32
  }
  func.func @transform_14(%arg0: i32, %arg1: i32) -> (i32, i32) {
    %c0_i32 = arith.constant 0 : i32
    %c0_i32_0 = arith.constant 0 : i32
    %c0_i32_1 = arith.constant 0 : i32
    return %c0_i32, %c0_i32_0 : i32, i32
  }
  func.func @transform_15(%arg0: i32, %arg1: i32) -> (i32, i32) {
    %c0_i32 = arith.constant 0 : i32
    %c0_i32_0 = arith.constant 0 : i32
    %c0_i32_1 = arith.constant 0 : i32
    return %c0_i32, %c0_i32_0 : i32, i32
  }
  func.func @transform_16(%arg0: i32, %arg1: i32) -> (i32, i32) {
    %c0_i32 = arith.constant 0 : i32
    %c0_i32_0 = arith.constant 0 : i32
    %c0_i32_1 = arith.constant 0 : i32
    return %c0_i32, %c0_i32_0 : i32, i32
  }
  func.func @transform_17(%arg0: i32, %arg1: i32) -> (i32, i32, i32) {
    %c0_i32 = arith.constant 0 : i32
    %c0_i32_0 = arith.constant 0 : i32
    return %arg0, %arg1, %c0_i32 : i32, i32, i32
  }
}

</mosaic_0001>

<llo_original>
// kernel: lit_layer_forward.2
$region0: #{lit_layer_forward.2}
  #allocation0 [shape = 'u32[]', space=smem, size = 0x4, offset = 0x4, fixed_abs, tag = 'smem constant byte address 0x4 - core index']
  #allocation1 [shape = 'u32[72,128]{1,0:T(1,128)}', space=vmem, size = 0x9000, scoped, tag = 'internal scratch']
  #allocation2 [shape = 'bf16[4,64,8]{2,1,0:T(8,128)(2,1)}', space=vmem, size = 0x10000, scoped, tag = 'scratch operand']
  #allocation3 [shape = 'bf16[4,64,8]{2,1,0:T(8,128)(2,1)}', space=vmem, size = 0x10000, scoped, tag = 'scratch operand']
  #allocation4 [shape = 'bf16[64,32]{1,0:T(8,128)(2,1)}', space=vmem, size = 0x4000, scoped, tag = 'scratch operand']
  %s0 = inlined_call_operand.vmem [shape: f32[2,64,32], index: 0, kind: input, shape index: {}]
  %s1 = inlined_call_operand.vmem [shape: f32[1,32], index: 1, kind: input, shape index: {}]
  %s2 = inlined_call_operand.vmem [shape: f32[1,32], index: 2, kind: input, shape index: {}]
  %s3 = inlined_call_operand.vmem [shape: bf16[32,32], index: 3, kind: input, shape index: {}]
  %s4 = inlined_call_operand.vmem [shape: f32[1,32], index: 4, kind: input, shape index: {}]
  %s5 = inlined_call_operand.vmem [shape: bf16[32,32], index: 5, kind: input, shape index: {}]
  %s6 = inlined_call_operand.vmem [shape: f32[1,32], index: 6, kind: input, shape index: {}]
  %s7 = inlined_call_operand.vmem [shape: bf16[32,32], index: 7, kind: input, shape index: {}]
  %s8 = inlined_call_operand.vmem [shape: f32[1,32], index: 8, kind: input, shape index: {}]
  %s9 = inlined_call_operand.vmem [shape: bf16[32,32], index: 9, kind: input, shape index: {}]
  %s10 = inlined_call_operand.vmem [shape: f32[1,32], index: 10, kind: input, shape index: {}]
  %s11 = inlined_call_operand.vmem [shape: f32[1,32], index: 11, kind: input, shape index: {}]
  %s12 = inlined_call_operand.vmem [shape: f32[1,32], index: 12, kind: input, shape index: {}]
  %s13 = inlined_call_operand.vmem [shape: bf16[32,128], index: 13, kind: input, shape index: {}]
  %s14 = inlined_call_operand.vmem [shape: f32[1,128], index: 14, kind: input, shape index: {}]
  %s15 = inlined_call_operand.vmem [shape: bf16[128,32], index: 15, kind: input, shape index: {}]
  %s16 = inlined_call_operand.vmem [shape: f32[1,32], index: 16, kind: input, shape index: {}]
  %s17 = inlined_call_operand.vmem [shape: f32[2,64,32], index: 17, kind: output, shape index: {}]
  %s18 = sld [smem:[#allocation0]]
  $region105: #{lit_layer_forward.2} parent=0
    _
  %s20 = ssub.s32 1, %s18
  %s21 = scalar_select 0, %s20, %s18
  loop: start=0, step=1, limit=6
  $region2: #{lit_layer_forward.2} parent=0 // loop_pre_header
    _
  $region3: #{lit_layer_forward.2} parent=0 // loop_header
    %s23 = sphi 0, %s27
    %p24 = scmp.ge.s32.totalorder %s23, 6
    %s30 = sphi 0, %s42
    %s31 = sphi 0, %s38
    %s32 = sphi 0, %s30
    %s33 = sphi 0, %s31
    %s34 = sphi 0, %s32
    %s35 = sphi 0, %s33
    %s45 = sphi 0, %s47
    %s48 = sphi 0, %s45
    %s49 = sphi 0, %s48
    %s65 = sphi 0, %s49
    %s69 = sphi 0, %s69
    %s71 = sphi 0, %s69
    %s72 = sphi 0, %s71
    %s86 = sphi 0, %s72
    %s90 = sphi 0, %s90
    %s92 = sphi 0, %s90
    %s93 = sphi 0, %s92
    %s107 = sphi 0, %s93
    %s111 = sphi 0, %s111
    %s113 = sphi 0, %s111
    %s114 = sphi 0, %s113
    %s128 = sphi 0, %s114
    %s132 = sphi 0, %s132
    %s134 = sphi 0, %s132
    %s135 = sphi 0, %s134
    %s149 = sphi 0, %s135
    %s153 = sphi 0, %s153
    %s155 = sphi 0, %s153
    %s156 = sphi 0, %s155
    %s170 = sphi 0, %s156
    %s174 = sphi 0, %s174
    %s176 = sphi 0, %s174
    %s177 = sphi 0, %s176
    %s191 = sphi 0, %s177
    %s195 = sphi 0, %s195
    %s197 = sphi 0, %s195
    %s198 = sphi 0, %s197
    %s212 = sphi 0, %s198
    %s216 = sphi 0, %s216
    %s218 = sphi 0, %s216
    %s219 = sphi 0, %s218
    %s233 = sphi 0, %s219
    %s237 = sphi 0, %s237
    %s239 = sphi 0, %s237
    %s240 = sphi 0, %s239
    %s254 = sphi 0, %s240
    %s258 = sphi 0, %s258
    %s260 = sphi 0, %s258
    %s261 = sphi 0, %s260
    %s275 = sphi 0, %s261
    %s279 = sphi 0, %s279
    %s281 = sphi 0, %s279
    %s282 = sphi 0, %s281
    %s296 = sphi 0, %s282
    %s300 = sphi 0, %s300
    %s302 = sphi 0, %s300
    %s303 = sphi 0, %s302
    %s317 = sphi 0, %s303
    %s321 = sphi 0, %s321
    %s323 = sphi 0, %s321
    %s324 = sphi 0, %s323
    %s338 = sphi 0, %s324
    %s342 = sphi 0, %s342
    %s344 = sphi 0, %s342
    %s345 = sphi 0, %s344
    %s359 = sphi 0, %s345
    %s363 = sphi 0, %s363
    %s365 = sphi 0, %s363
    %s366 = sphi 0, %s365
    %s380 = sphi 0, %s366
    %s384 = sphi 0, %s384
    %s386 = sphi 0, %s384
    %s387 = sphi 0, %s386
    %s401 = sphi 0, %s387
    %s409 = sphi 0, %s411
    %s412 = sphi 0, %s409
    %s413 = sphi 0, %s412
    %s429 = sphi 0, %s413
  $region4: #{lit_layer_forward.2} parent=0 // loop_header_branch
    %26 = sbr.rel (%p24) target = $region8
  $region5: #{lit_layer_forward.2} parent=0 // loop_body
    %s28 = ssub.s32 %s23, 1
    %s29 = ssub.s32 %s23, 2
    %s36 = sadd.s32 1, %s31
    %p37 = scmp.ge.s32.totalorder %s36, 2
    %s38 = scalar_select %p37, 0, %s36
    %s39 = sadd.s32 1, %s30
    %s40 = scalar_select %p37, %s39, %s30
    %p41 = scmp.ge.s32.totalorder %s40, 2
    %s42 = scalar_select %p41, 0, %s40
    %s43 = ssub.s32 %s30, %s42
    %p44 = scmp.eq.s32.totalorder %s43, 0
    %s46 = sadd.s32 %s45, 1
    %s47 = scalar_select %p44, %s45, %s46
    %p50 = pneg %p44
    %p51 = scmp.eq.s32.totalorder %s23, 3
    %p52 = por %p50, %p51
    %p53 = scmp.ne.s32.totalorder %s45, %s48
    %p54 = scmp.eq.s32.totalorder %s23, 0
    %p55 = por %p53, %p54
    %p56 = scmp.ne.s32.totalorder %s45, %s48
    %p57 = scmp.eq.s32.totalorder %s28, 3
    %p58 = por %p56, %p57
    %p59 = scmp.ne.s32.totalorder %s48, %s49
    %p60 = scmp.eq.s32.totalorder %s28, 0
    %p61 = por %p59, %p60
    %p62 = scmp.ne.s32.totalorder %s48, %s49
    %p63 = scmp.eq.s32.totalorder %s29, 3
    %p64 = por %p62, %p63
    %p66 = scmp.ne.s32.totalorder %s49, %s65
    %p67 = scmp.eq.s32.totalorder %s29, 0
    %p68 = por %p66, %p67
    %s70 = sadd.s32 %s69, 1
    %p73 = scmp.eq.s32.totalorder %s23, 3
    %p74 = scmp.ne.s32.totalorder %s69, %s71
    %p75 = scmp.eq.s32.totalorder %s23, 0
    %p76 = por %p74, %p75
    %p77 = scmp.ne.s32.totalorder %s69, %s71
    %p78 = scmp.eq.s32.totalorder %s28, 3
    %p79 = por %p77, %p78
    %p80 = scmp.ne.s32.totalorder %s71, %s72
    %p81 = scmp.eq.s32.totalorder %s28, 0
    %p82 = por %p80, %p81
    %p83 = scmp.ne.s32.totalorder %s71, %s72
    %p84 = scmp.eq.s32.totalorder %s29, 3
    %p85 = por %p83, %p84
    %p87 = scmp.ne.s32.totalorder %s72, %s86
    %p88 = scmp.eq.s32.totalorder %s29, 0
    %p89 = por %p87, %p88
    %s91 = sadd.s32 %s90, 1
    %p94 = scmp.eq.s32.totalorder %s23, 3
    %p95 = scmp.ne.s32.totalorder %s90, %s92
    %p96 = scmp.eq.s32.totalorder %s23, 0
    %p97 = por %p95, %p96
    %p98 = scmp.ne.s32.totalorder %s90, %s92
    %p99 = scmp.eq.s32.totalorder %s28, 3
    %p100 = por %p98, %p99
    %p101 = scmp.ne.s32.totalorder %s92, %s93
    %p102 = scmp.eq.s32.totalorder %s28, 0
    %p103 = por %p101, %p102
    %p104 = scmp.ne.s32.totalorder %s92, %s93
    %p105 = scmp.eq.s32.totalorder %s29, 3
    %p106 = por %p104, %p105
    %p108 = scmp.ne.s32.totalorder %s93, %s107
    %p109 = scmp.eq.s32.totalorder %s29, 0
    %p110 = por %p108, %p109
    %s112 = sadd.s32 %s111, 1
    %p115 = scmp.eq.s32.totalorder %s23, 3
    %p116 = scmp.ne.s32.totalorder %s111, %s113
    %p117 = scmp.eq.s32.totalorder %s23, 0
    %p118 = por %p116, %p117
    %p119 = scmp.ne.s32.totalorder %s111, %s113
    %p120 = scmp.eq.s32.totalorder %s28, 3
    %p121 = por %p119, %p120
    %p122 = scmp.ne.s32.totalorder %s113, %s114
    %p123 = scmp.eq.s32.totalorder %s28, 0
    %p124 = por %p122, %p123
    %p125 = scmp.ne.s32.totalorder %s113, %s114
    %p126 = scmp.eq.s32.totalorder %s29, 3
    %p127 = por %p125, %p126
    %p129 = scmp.ne.s32.totalorder %s114, %s128
    %p130 = scmp.eq.s32.totalorder %s29, 0
    %p131 = por %p129, %p130
    %s133 = sadd.s32 %s132, 1
    %p136 = scmp.eq.s32.totalorder %s23, 3
    %p137 = scmp.ne.s32.totalorder %s132, %s134
    %p138 = scmp.eq.s32.totalorder %s23, 0
    %p139 = por %p137, %p138
    %p140 = scmp.ne.s32.totalorder %s132, %s134
    %p141 = scmp.eq.s32.totalorder %s28, 3
    %p142 = por %p140, %p141
    %p143 = scmp.ne.s32.totalorder %s134, %s135
    %p144 = scmp.eq.s32.totalorder %s28, 0
    %p145 = por %p143, %p144
    %p146 = scmp.ne.s32.totalorder %s134, %s135
    %p147 = scmp.eq.s32.totalorder %s29, 3
    %p148 = por %p146, %p147
    %p150 = scmp.ne.s32.totalorder %s135, %s149
    %p151 = scmp.eq.s32.totalorder %s29, 0
    %p152 = por %p150, %p151
    %s154 = sadd.s32 %s153, 1
    %p157 = scmp.eq.s32.totalorder %s23, 3
    %p158 = scmp.ne.s32.totalorder %s153, %s155
    %p159 = scmp.eq.s32.totalorder %s23, 0
    %p160 = por %p158, %p159
    %p161 = scmp.ne.s32.totalorder %s153, %s155
    %p162 = scmp.eq.s32.totalorder %s28, 3
    %p163 = por %p161, %p162
    %p164 = scmp.ne.s32.totalorder %s155, %s156
    %p165 = scmp.eq.s32.totalorder %s28, 0
    %p166 = por %p164, %p165
    %p167 = scmp.ne.s32.totalorder %s155, %s156
    %p168 = scmp.eq.s32.totalorder %s29, 3
    %p169 = por %p167, %p168
    %p171 = scmp.ne.s32.totalorder %s156, %s170
    %p172 = scmp.eq.s32.totalorder %s29, 0
    %p173 = por %p171, %p172
    %s175 = sadd.s32 %s174, 1
    %p178 = scmp.eq.s32.totalorder %s23, 3
    %p179 = scmp.ne.s32.totalorder %s174, %s176
    %p180 = scmp.eq.s32.totalorder %s23, 0
    %p181 = por %p179, %p180
    %p182 = scmp.ne.s32.totalorder %s174, %s176
    %p183 = scmp.eq.s32.totalorder %s28, 3
    %p184 = por %p182, %p183
    %p185 = scmp.ne.s32.totalorder %s176, %s177
    %p186 = scmp.eq.s32.totalorder %s28, 0
    %p187 = por %p185, %p186
    %p188 = scmp.ne.s32.totalorder %s176, %s177
    %p189 = scmp.eq.s32.totalorder %s29, 3
    %p190 = por %p188, %p189
    %p192 = scmp.ne.s32.totalorder %s177, %s191
    %p193 = scmp.eq.s32.totalorder %s29, 0
    %p194 = por %p192, %p193
    %s196 = sadd.s32 %s195, 1
    %p199 = scmp.eq.s32.totalorder %s23, 3
    %p200 = scmp.ne.s32.totalorder %s195, %s197
    %p201 = scmp.eq.s32.totalorder %s23, 0
    %p202 = por %p200, %p201
    %p203 = scmp.ne.s32.totalorder %s195, %s197
    %p204 = scmp.eq.s32.totalorder %s28, 3
    %p205 = por %p203, %p204
    %p206 = scmp.ne.s32.totalorder %s197, %s198
    %p207 = scmp.eq.s32.totalorder %s28, 0
    %p208 = por %p206, %p207
    %p209 = scmp.ne.s32.totalorder %s197, %s198
    %p210 = scmp.eq.s32.totalorder %s29, 3
    %p211 = por %p209, %p210
    %p213 = scmp.ne.s32.totalorder %s198, %s212
    %p214 = scmp.eq.s32.totalorder %s29, 0
    %p215 = por %p213, %p214
    %s217 = sadd.s32 %s216, 1
    %p220 = scmp.eq.s32.totalorder %s23, 3
    %p221 = scmp.ne.s32.totalorder %s216, %s218
    %p222 = scmp.eq.s32.totalorder %s23, 0
    %p223 = por %p221, %p222
    %p224 = scmp.ne.s32.totalorder %s216, %s218
    %p225 = scmp.eq.s32.totalorder %s28, 3
    %p226 = por %p224, %p225
    %p227 = scmp.ne.s32.totalorder %s218, %s219
    %p228 = scmp.eq.s32.totalorder %s28, 0
    %p229 = por %p227, %p228
    %p230 = scmp.ne.s32.totalorder %s218, %s219
    %p231 = scmp.eq.s32.totalorder %s29, 3
    %p232 = por %p230, %p231
    %p234 = scmp.ne.s32.totalorder %s219, %s233
    %p235 = scmp.eq.s32.totalorder %s29, 0
    %p236 = por %p234, %p235
    %s238 = sadd.s32 %s237, 1
    %p241 = scmp.eq.s32.totalorder %s23, 3
    %p242 = scmp.ne.s32.totalorder %s237, %s239
    %p243 = scmp.eq.s32.totalorder %s23, 0
    %p244 = por %p242, %p243
    %p245 = scmp.ne.s32.totalorder %s237, %s239
    %p246 = scmp.eq.s32.totalorder %s28, 3
    %p247 = por %p245, %p246
    %p248 = scmp.ne.s32.totalorder %s239, %s240
    %p249 = scmp.eq.s32.totalorder %s28, 0
    %p250 = por %p248, %p249
    %p251 = scmp.ne.s32.totalorder %s239, %s240
    %p252 = scmp.eq.s32.totalorder %s29, 3
    %p253 = por %p251, %p252
    %p255 = scmp.ne.s32.totalorder %s240, %s254
    %p256 = scmp.eq.s32.totalorder %s29, 0
    %p257 = por %p255, %p256
    %s259 = sadd.s32 %s258, 1
    %p262 = scmp.eq.s32.totalorder %s23, 3
    %p263 = scmp.ne.s32.totalorder %s258, %s260
    %p264 = scmp.eq.s32.totalorder %s23, 0
    %p265 = por %p263, %p264
    %p266 = scmp.ne.s32.totalorder %s258, %s260
    %p267 = scmp.eq.s32.totalorder %s28, 3
    %p268 = por %p266, %p267
    %p269 = scmp.ne.s32.totalorder %s260, %s261
    %p270 = scmp.eq.s32.totalorder %s28, 0
    %p271 = por %p269, %p270
    %p272 = scmp.ne.s32.totalorder %s260, %s261
    %p273 = scmp.eq.s32.totalorder %s29, 3
    %p274 = por %p272, %p273
    %p276 = scmp.ne.s32.totalorder %s261, %s275
    %p277 = scmp.eq.s32.totalorder %s29, 0
    %p278 = por %p276, %p277
    %s280 = sadd.s32 %s279, 1
    %p283 = scmp.eq.s32.totalorder %s23, 3
    %p284 = scmp.ne.s32.totalorder %s279, %s281
    %p285 = scmp.eq.s32.totalorder %s23, 0
    %p286 = por %p284, %p285
    %p287 = scmp.ne.s32.totalorder %s279, %s281
    %p288 = scmp.eq.s32.totalorder %s28, 3
    %p289 = por %p287, %p288
    %p290 = scmp.ne.s32.totalorder %s281, %s282
    %p291 = scmp.eq.s32.totalorder %s28, 0
    %p292 = por %p290, %p291
    %p293 = scmp.ne.s32.totalorder %s281, %s282
    %p294 = scmp.eq.s32.totalorder %s29, 3
    %p295 = por %p293, %p294
    %p297 = scmp.ne.s32.totalorder %s282, %s296
    %p298 = scmp.eq.s32.totalorder %s29, 0
    %p299 = por %p297, %p298
    %s301 = sadd.s32 %s300, 1
    %p304 = scmp.eq.s32.totalorder %s23, 3
    %p305 = scmp.ne.s32.totalorder %s300, %s302
    %p306 = scmp.eq.s32.totalorder %s23, 0
    %p307 = por %p305, %p306
    %p308 = scmp.ne.s32.totalorder %s300, %s302
    %p309 = scmp.eq.s32.totalorder %s28, 3
    %p310 = por %p308, %p309
    %p311 = scmp.ne.s32.totalorder %s302, %s303
    %p312 = scmp.eq.s32.totalorder %s28, 0
    %p313 = por %p311, %p312
    %p314 = scmp.ne.s32.totalorder %s302, %s303
    %p315 = scmp.eq.s32.totalorder %s29, 3
    %p316 = por %p314, %p315
    %p318 = scmp.ne.s32.totalorder %s303, %s317
    %p319 = scmp.eq.s32.totalorder %s29, 0
    %p320 = por %p318, %p319
    %s322 = sadd.s32 %s321, 1
    %p325 = scmp.eq.s32.totalorder %s23, 3
    %p326 = scmp.ne.s32.totalorder %s321, %s323
    %p327 = scmp.eq.s32.totalorder %s23, 0
    %p328 = por %p326, %p327
    %p329 = scmp.ne.s32.totalorder %s321, %s323
    %p330 = scmp.eq.s32.totalorder %s28, 3
    %p331 = por %p329, %p330
    %p332 = scmp.ne.s32.totalorder %s323, %s324
    %p333 = scmp.eq.s32.totalorder %s28, 0
    %p334 = por %p332, %p333
    %p335 = scmp.ne.s32.totalorder %s323, %s324
    %p336 = scmp.eq.s32.totalorder %s29, 3
    %p337 = por %p335, %p336
    %p339 = scmp.ne.s32.totalorder %s324, %s338
    %p340 = scmp.eq.s32.totalorder %s29, 0
    %p341 = por %p339, %p340
    %s343 = sadd.s32 %s342, 1
    %p346 = scmp.eq.s32.totalorder %s23, 3
    %p347 = scmp.ne.s32.totalorder %s342, %s344
    %p348 = scmp.eq.s32.totalorder %s23, 0
    %p349 = por %p347, %p348
    %p350 = scmp.ne.s32.totalorder %s342, %s344
    %p351 = scmp.eq.s32.totalorder %s28, 3
    %p352 = por %p350, %p351
    %p353 = scmp.ne.s32.totalorder %s344, %s345
    %p354 = scmp.eq.s32.totalorder %s28, 0
    %p355 = por %p353, %p354
    %p356 = scmp.ne.s32.totalorder %s344, %s345
    %p357 = scmp.eq.s32.totalorder %s29, 3
    %p358 = por %p356, %p357
    %p360 = scmp.ne.s32.totalorder %s345, %s359
    %p361 = scmp.eq.s32.totalorder %s29, 0
    %p362 = por %p360, %p361
    %s364 = sadd.s32 %s363, 1
    %p367 = scmp.eq.s32.totalorder %s23, 3
    %p368 = scmp.ne.s32.totalorder %s363, %s365
    %p369 = scmp.eq.s32.totalorder %s23, 0
    %p370 = por %p368, %p369
    %p371 = scmp.ne.s32.totalorder %s363, %s365
    %p372 = scmp.eq.s32.totalorder %s28, 3
    %p373 = por %p371, %p372
    %p374 = scmp.ne.s32.totalorder %s365, %s366
    %p375 = scmp.eq.s32.totalorder %s28, 0
    %p376 = por %p374, %p375
    %p377 = scmp.ne.s32.totalorder %s365, %s366
    %p378 = scmp.eq.s32.totalorder %s29, 3
    %p379 = por %p377, %p378
    %p381 = scmp.ne.s32.totalorder %s366, %s380
    %p382 = scmp.eq.s32.totalorder %s29, 0
    %p383 = por %p381, %p382
    %s385 = sadd.s32 %s384, 1
    %p388 = scmp.eq.s32.totalorder %s23, 3
    %p389 = scmp.ne.s32.totalorder %s384, %s386
    %p390 = scmp.eq.s32.totalorder %s23, 0
    %p391 = por %p389, %p390
    %p392 = scmp.ne.s32.totalorder %s384, %s386
    %p393 = scmp.eq.s32.totalorder %s28, 3
    %p394 = por %p392, %p393
    %p395 = scmp.ne.s32.totalorder %s386, %s387
    %p396 = scmp.eq.s32.totalorder %s28, 0
    %p397 = por %p395, %p396
    %p398 = scmp.ne.s32.totalorder %s386, %s387
    %p399 = scmp.eq.s32.totalorder %s29, 3
    %p400 = por %p398, %p399
    %p402 = scmp.ne.s32.totalorder %s387, %s401
    %p403 = scmp.eq.s32.totalorder %s29, 0
    %p404 = por %p402, %p403
    %s405 = ssub.s32 %s30, %s42
    %s406 = ssub.s32 %s31, %s38
    %s407 = sor.u32 %s405, %s406
    %p408 = scmp.eq.s32.totalorder %s407, 0
    %s410 = sadd.s32 %s409, 1
    %s411 = scalar_select %p408, %s409, %s410
    %p414 = pneg %p408
    %p415 = scmp.eq.s32.totalorder %s23, 3
    %p416 = por %p414, %p415
    %p417 = scmp.ne.s32.totalorder %s409, %s412
    %p418 = scmp.eq.s32.totalorder %s23, 0
    %p419 = por %p417, %p418
    %p420 = scmp.ne.s32.totalorder %s409, %s412
    %p421 = scmp.eq.s32.totalorder %s28, 3
    %p422 = por %p420, %p421
    %p423 = scmp.ne.s32.totalorder %s412, %s413
    %p424 = scmp.eq.s32.totalorder %s28, 0
    %p425 = por %p423, %p424
    %p426 = scmp.ne.s32.totalorder %s412, %s413
    %p427 = scmp.eq.s32.totalorder %s29, 3
    %p428 = por %p426, %p427
    %p430 = scmp.ne.s32.totalorder %s413, %s429
    %p431 = scmp.eq.s32.totalorder %s29, 0
    %p432 = por %p430, %p431
    %p433 = scmp.le.s32.totalorder 1, %s23
    %p434 = scmp.lt.s32.totalorder %s23, 5
    %p435 = pnand %p433, %p434
    %p436 = pneg %p435
    // Predicated region
    $region9: #{lit_layer_forward.2} parent=5 // pred_check
      _
    $region10: #{lit_layer_forward.2} parent=5 // pred_check_branch
      %438 = sbr.rel (%p435) target = $region12
    $region11: #{lit_layer_forward.2} parent=5 // pred_region
      %s439 = ssub.s32 %s23, 1
      // Predicated region
      $region13: #{lit_layer_forward.2} parent=11 // pred_check
        %p440 = pneg %p82
      $region14: #{lit_layer_forward.2} parent=11 // pred_check_branch
        %442 = sbr.rel (%p440) target = $region16
      $region15: #{lit_layer_forward.2} parent=11 // pred_region
        _
      $region16: #{lit_layer_forward.2} parent=11 // pred_fallthru
        _
      // Predicated region
      $region17: #{lit_layer_forward.2} parent=11 // pred_check
        %p443 = pneg %p103
      $region18: #{lit_layer_forward.2} parent=11 // pred_check_branch
        %445 = sbr.rel (%p443) target = $region20
      $region19: #{lit_layer_forward.2} parent=11 // pred_region
        _
      $region20: #{lit_layer_forward.2} parent=11 // pred_fallthru
        _
      // Predicated region
      $region21: #{lit_layer_forward.2} parent=11 // pred_check
        %p446 = pneg %p124
      $region22: #{lit_layer_forward.2} parent=11 // pred_check_branch
        %448 = sbr.rel (%p446) target = $region24
      $region23: #{lit_layer_forward.2} parent=11 // pred_region
        _
      $region24: #{lit_layer_forward.2} parent=11 // pred_fallthru
        _
      // Predicated region
      $region25: #{lit_layer_forward.2} parent=11 // pred_check
        %p449 = pneg %p145
      $region26: #{lit_layer_forward.2} parent=11 // pred_check_branch
        %451 = sbr.rel (%p449) target = $region28
      $region27: #{lit_layer_forward.2} parent=11 // pred_region
        _
      $region28: #{lit_layer_forward.2} parent=11 // pred_fallthru
        _
      // Predicated region
      $region29: #{lit_layer_forward.2} parent=11 // pred_check
        %p452 = pneg %p166
      $region30: #{lit_layer_forward.2} parent=11 // pred_check_branch
        %454 = sbr.rel (%p452) target = $region32
      $region31: #{lit_layer_forward.2} parent=11 // pred_region
        _
      $region32: #{lit_layer_forward.2} parent=11 // pred_fallthru
        _
      // Predicated region
      $region33: #{lit_layer_forward.2} parent=11 // pred_check
        %p455 = pneg %p187
      $region34: #{lit_layer_forward.2} parent=11 // pred_check_branch
        %457 = sbr.rel (%p455) target = $region36
      $region35: #{lit_layer_forward.2} parent=11 // pred_region
        _
      $region36: #{lit_layer_forward.2} parent=11 // pred_fallthru
        _
      // Predicated region
      $region37: #{lit_layer_forward.2} parent=11 // pred_check
        %p458 = pneg %p208
      $region38: #{lit_layer_forward.2} parent=11 // pred_check_branch
        %460 = sbr.rel (%p458) target = $region40
      $region39: #{lit_layer_forward.2} parent=11 // pred_region
        _
      $region40: #{lit_layer_forward.2} parent=11 // pred_fallthru
        _
      // Predicated region
      $region41: #{lit_layer_forward.2} parent=11 // pred_check
        %p461 = pneg %p229
      $region42: #{lit_layer_forward.2} parent=11 // pred_check_branch
        %463 = sbr.rel (%p461) target = $region44
      $region43: #{lit_layer_forward.2} parent=11 // pred_region
        _
      $region44: #{lit_layer_forward.2} parent=11 // pred_fallthru
        _
      // Predicated region
      $region45: #{lit_layer_forward.2} parent=11 // pred_check
        %p464 = pneg %p250
      $region46: #{lit_layer_forward.2} parent=11 // pred_check_branch
        %466 = sbr.rel (%p464) target = $region48
      $region47: #{lit_layer_forward.2} parent=11 // pred_region
        _
      $region48: #{lit_layer_forward.2} parent=11 // pred_fallthru
        _
      // Predicated region
      $region49: #{lit_layer_forward.2} parent=11 // pred_check
        %p467 = pneg %p271
      $region50: #{lit_layer_forward.2} parent=11 // pred_check_branch
        %469 = sbr.rel (%p467) target = $region52
      $region51: #{lit_layer_forward.2} parent=11 // pred_region
        _
      $region52: #{lit_layer_forward.2} parent=11 // pred_fallthru
        _
      // Predicated region
      $region53: #{lit_layer_forward.2} parent=11 // pred_check
        %p470 = pneg %p292
      $region54: #{lit_layer_forward.2} parent=11 // pred_check_branch
        %472 = sbr.rel (%p470) target = $region56
      $region55: #{lit_layer_forward.2} parent=11 // pred_region
        _
      $region56: #{lit_layer_forward.2} parent=11 // pred_fallthru
        _
      // Predicated region
      $region57: #{lit_layer_forward.2} parent=11 // pred_check
        %p473 = pneg %p313
      $region58: #{lit_layer_forward.2} parent=11 // pred_check_branch
        %475 = sbr.rel (%p473) target = $region60
      $region59: #{lit_layer_forward.2} parent=11 // pred_region
        _
      $region60: #{lit_layer_forward.2} parent=11 // pred_fallthru
        _
      // Predicated region
      $region61: #{lit_layer_forward.2} parent=11 // pred_check
        %p476 = pneg %p334
      $region62: #{lit_layer_forward.2} parent=11 // pred_check_branch
        %478 = sbr.rel (%p476) target = $region64
      $region63: #{lit_layer_forward.2} parent=11 // pred_region
        _
      $region64: #{lit_layer_forward.2} parent=11 // pred_fallthru
        _
      // Predicated region
      $region65: #{lit_layer_forward.2} parent=11 // pred_check
        %p479 = pneg %p355
      $region66: #{lit_layer_forward.2} parent=11 // pred_check_branch
        %481 = sbr.rel (%p479) target = $region68
      $region67: #{lit_layer_forward.2} parent=11 // pred_region
        _
      $region68: #{lit_layer_forward.2} parent=11 // pred_fallthru
        _
      // Predicated region
      $region69: #{lit_layer_forward.2} parent=11 // pred_check
        %p482 = pneg %p376
      $region70: #{lit_layer_forward.2} parent=11 // pred_check_branch
        %484 = sbr.rel (%p482) target = $region72
      $region71: #{lit_layer_forward.2} parent=11 // pred_region
        _
      $region72: #{lit_layer_forward.2} parent=11 // pred_fallthru
        _
      // Predicated region
      $region73: #{lit_layer_forward.2} parent=11 // pred_check
        %p485 = pneg %p397
      $region74: #{lit_layer_forward.2} parent=11 // pred_check_branch
        %487 = sbr.rel (%p485) target = $region76
      $region75: #{lit_layer_forward.2} parent=11 // pred_region
        _
      $region76: #{lit_layer_forward.2} parent=11 // pred_fallthru
        _
    $region12: #{lit_layer_forward.2} parent=5 // pred_fallthru
      _
    %p488 = scmp.lt.s32.totalorder %s23, 4
    // Predicated region
    $region77: #{lit_layer_forward.2} parent=5 // pred_check
      %p489 = pneg %p488
    $region78: #{lit_layer_forward.2} parent=5 // pred_check_branch
      %491 = sbr.rel (%p489) target = $region80
    $region79: #{lit_layer_forward.2} parent=5 // pred_region
      // Predicated region
      $region81: #{lit_layer_forward.2} parent=79 // pred_check
        %p492 = pneg %p55
      $region82: #{lit_layer_forward.2} parent=79 // pred_check_branch
        %494 = sbr.rel (%p492) target = $region84
      $region83: #{lit_layer_forward.2} parent=79 // pred_region
        %p495 = scmp.lt.s32.totalorder %s30, 1
        %s496 = scalar_select %p495, %s30, 1
        %s497 = smul.addr %s496, 8
        %s498 = smul.addr %s497, 8
        %s499 = scalar_lea.vmem %s0, %s498
      $region84: #{lit_layer_forward.2} parent=79 // pred_fallthru
        _
    $region80: #{lit_layer_forward.2} parent=5 // pred_fallthru
      _
    %p500 = scmp.le.s32.totalorder 1, %s23
    %p501 = scmp.lt.s32.totalorder %s23, 5
    %p502 = pnand %p500, %p501
    %p503 = pneg %p502
    // Predicated region
    $region85: #{lit_layer_forward.2} parent=5 // pred_check
      _
    $region86: #{lit_layer_forward.2} parent=5 // pred_check_branch
      %505 = sbr.rel (%p502) target = $region88
    $region87: #{lit_layer_forward.2} parent=5 // pred_region
      %s506 = ssub.s32 %s23, 1
      %p507 = scmp.lt.s32.totalorder %s32, 1
      %s508 = scalar_select %p507, %s32, 1
      %s509 = smul.addr %s508, 8
      %s510 = smul.addr %s509, 8
      %s511 = scalar_lea.vmem %s0, %s510
      %p512 = pneg %p61
      %p513 = pneg %p58
      %p514 = pneg %p82
      %p515 = pneg %p79
      %p516 = pneg %p103
      %p517 = pneg %p100
      %p518 = pneg %p124
      %p519 = pneg %p121
      %p520 = pneg %p145
      %p521 = pneg %p142
      %p522 = pneg %p166
      %p523 = pneg %p163
      %p524 = pneg %p187
      %p525 = pneg %p184
      %p526 = pneg %p208
      %p527 = pneg %p205
      %p528 = pneg %p229
      %p529 = pneg %p226
      %p530 = pneg %p250
      %p531 = pneg %p247
      %p532 = pneg %p271
      %p533 = pneg %p268
      %p534 = pneg %p292
      %p535 = pneg %p289
      %p536 = pneg %p313
      %p537 = pneg %p310
      %p538 = pneg %p334
      %p539 = pneg %p331
      %p540 = pneg %p355
      %p541 = pneg %p352
      %p542 = pneg %p376
      %p543 = pneg %p373
      %p544 = pneg %p397
      %p545 = pneg %p394
      %p546 = pneg %p425
      %p547 = pneg %p422
      %s548 = smul.u32 4, %s33
      %p549 = scmp.lt.s32.totalorder %s32, 1
      %s550 = scalar_select %p549, %s32, 1
      %p551 = scmp.lt.s32.totalorder %s548, 7
      %s552 = scalar_select %p551, %s548, 7
      %s553 = smul.addr %s550, 8
      %s554 = sadd.s32 %s552, %s553
      %s555 = smul.addr %s554, 8
      %s556 = scalar_lea.vmem %s17, %s555
      %p557 = scmp.lt.s32.totalorder %s32, 1
      %s558 = scalar_select %p557, %s32, 1
      %s559 = smul.addr %s558, 8
      %s560 = smul.addr %s559, 8
      %s561 = scalar_lea.vmem %s0, %s560
      %s562 = smul.u32 4, %s33
      %p563 = scmp.lt.s32.totalorder %s32, 1
      %s564 = scalar_select %p563, %s32, 1
      %p565 = scmp.lt.s32.totalorder %s562, 7
      %s566 = scalar_select %p565, %s562, 7
      %s567 = smul.addr %s564, 8
      %s568 = sadd.s32 %s566, %s567
      %s569 = smul.addr %s568, 8
      %s570 = scalar_lea.vmem %s17, %s569
      %s571 = smul.u32 4, %s33
      %p573 = scmp.eq.s32.totalorder %s33, 0
      // Predicated region
      $region89: #{lit_layer_forward.2} parent=87 // pred_check
        %p574 = pneg %p573
      $region90: #{lit_layer_forward.2} parent=87 // pred_check_branch
        %576 = sbr.rel (%p574) target = $region92
      $region91: #{lit_layer_forward.2} parent=87 // pred_region
        %v577 = vld [vmem:[%s561] sm:$0xff]
        %v578 = vld [vmem:[%s561 + $0x8] sm:$0xff]
        %v579 = vld [vmem:[%s561 + $0x10] sm:$0xff]
        %v580 = vld [vmem:[%s561 + $0x18] sm:$0xff]
        %v581 = vld [vmem:[%s561 + $0x20] sm:$0xff]
        %v582 = vld [vmem:[%s561 + $0x28] sm:$0xff]
        %v583 = vld [vmem:[%s561 + $0x30] sm:$0xff]
        %v584 = vld [vmem:[%s561 + $0x38] sm:$0xff]
        %vm585 = vcmask 261120
        %v586 = vsel %vm585, %v577, 0.0
        %587 = vadd.xlane.f32.xlu0 %v586
        %v588 = vpop.xlane.xlu0 %587
        %v589 = vsel %vm585, %v578, 0.0
        %590 = vadd.xlane.f32.xlu0 %v589
        %v591 = vpop.xlane.xlu0 %590
        %v592 = vsel %vm585, %v579, 0.0
        %593 = vadd.xlane.f32.xlu0 %v592
        %v594 = vpop.xlane.xlu0 %593
        %v595 = vsel %vm585, %v580, 0.0
        %596 = vadd.xlane.f32.xlu0 %v595
        %v597 = vpop.xlane.xlu0 %596
        %v598 = vsel %vm585, %v581, 0.0
        %599 = vadd.xlane.f32.xlu0 %v598
        %v600 = vpop.xlane.xlu0 %599
        %v601 = vsel %vm585, %v582, 0.0
        %602 = vadd.xlane.f32.xlu0 %v601
        %v603 = vpop.xlane.xlu0 %602
        %v604 = vsel %vm585, %v583, 0.0
        %605 = vadd.xlane.f32.xlu0 %v604
        %v606 = vpop.xlane.xlu0 %605
        %v607 = vsel %vm585, %v584, 0.0
        %608 = vadd.xlane.f32.xlu0 %v607
        %v609 = vpop.xlane.xlu0 %608
        %v610 = vrcp.pop 32.0
        %v611 = vmul.f32 32.0, %v610
        %v612 = vsub.f32 1.0, %v611
        %v613 = vmul.f32 %v610, %v612
        %v614 = vadd.f32 %v610, %v613
        %vm615 = vweird.f32 %v610
        %v616 = vsel %vm615, %v610, %v614
        %v617 = vmul.f32 %v588, %v616
        %v618 = vmul.f32 %v591, %v616
        %v619 = vmul.f32 %v594, %v616
        %v620 = vmul.f32 %v597, %v616
        %v621 = vmul.f32 %v600, %v616
        %v622 = vmul.f32 %v603, %v616
        %v623 = vmul.f32 %v606, %v616
        %v624 = vmul.f32 %v609, %v616
        %v625 = vsub.f32 %v577, %v617
        %v626 = vsub.f32 %v578, %v618
        %v627 = vsub.f32 %v579, %v619
        %v628 = vsub.f32 %v580, %v620
        %v629 = vsub.f32 %v581, %v621
        %v630 = vsub.f32 %v582, %v622
        %v631 = vsub.f32 %v583, %v623
        %v632 = vsub.f32 %v584, %v624
        %v633 = vmul.f32 %v625, %v625
        %v634 = vmul.f32 %v626, %v626
        %v635 = vmul.f32 %v627, %v627
        %v636 = vmul.f32 %v628, %v628
        %v637 = vmul.f32 %v629, %v629
        %v638 = vmul.f32 %v630, %v630
        %v639 = vmul.f32 %v631, %v631
        %v640 = vmul.f32 %v632, %v632
        %v641 = vsel %vm585, %v633, 0.0
        %642 = vadd.xlane.f32.xlu0 %v641
        %v643 = vpop.xlane.xlu0 %642
        %v644 = vsel %vm585, %v634, 0.0
        %645 = vadd.xlane.f32.xlu0 %v644
        %v646 = vpop.xlane.xlu0 %645
        %v647 = vsel %vm585, %v635, 0.0
        %648 = vadd.xlane.f32.xlu0 %v647
        %v649 = vpop.xlane.xlu0 %648
        %v650 = vsel %vm585, %v636, 0.0
        %651 = vadd.xlane.f32.xlu0 %v650
        %v652 = vpop.xlane.xlu0 %651
        %v653 = vsel %vm585, %v637, 0.0
        %654 = vadd.xlane.f32.xlu0 %v653
        %v655 = vpop.xlane.xlu0 %654
        %v656 = vsel %vm585, %v638, 0.0
        %657 = vadd.xlane.f32.xlu0 %v656
        %v658 = vpop.xlane.xlu0 %657
        %v659 = vsel %vm585, %v639, 0.0
        %660 = vadd.xlane.f32.xlu0 %v659
        %v661 = vpop.xlane.xlu0 %660
        %v662 = vsel %vm585, %v640, 0.0
        %663 = vadd.xlane.f32.xlu0 %v662
        %v664 = vpop.xlane.xlu0 %663
        %v665 = vmul.f32 %v643, %v616
        %v666 = vmul.f32 %v646, %v616
        %v667 = vmul.f32 %v649, %v616
        %v668 = vmul.f32 %v652, %v616
        %v669 = vmul.f32 %v655, %v616
        %v670 = vmul.f32 %v658, %v616
        %v671 = vmul.f32 %v661, %v616
        %v672 = vmul.f32 %v664, %v616
        %v673 = vadd.f32 %v665, 1e-05
        %v674 = vadd.f32 %v666, 1e-05
        %v675 = vadd.f32 %v667, 1e-05
        %v676 = vadd.f32 %v668, 1e-05
        %v677 = vadd.f32 %v669, 1e-05
        %v678 = vadd.f32 %v670, 1e-05
        %v679 = vadd.f32 %v671, 1e-05
        %v680 = vadd.f32 %v672, 1e-05
        %v681 = vrsqrt.pop %v673
        %v682 = vmul.f32 %v681, %v673
        %v683 = vmul.f32 %v682, %v681
        %v684 = vmul.f32 0.5, %v683
        %v685 = vsub.f32 1.5, %v684
        %v686 = vmul.f32 %v681, %v685
        %vm687 = vweird.f32 %v673
        %vm688 = vweird.f32 %v681
        %vm689 = vmor %vm687, %vm688
        %v690 = vsel %vm689, %v681, %v686
        %v691 = vrsqrt.pop %v674
        %v692 = vmul.f32 %v691, %v674
        %v693 = vmul.f32 %v692, %v691
        %v694 = vmul.f32 0.5, %v693
        %v695 = vsub.f32 1.5, %v694
        %v696 = vmul.f32 %v691, %v695
        %vm697 = vweird.f32 %v674
        %vm698 = vweird.f32 %v691
        %vm699 = vmor %vm697, %vm698
        %v700 = vsel %vm699, %v691, %v696
        %v701 = vrsqrt.pop %v675
        %v702 = vmul.f32 %v701, %v675
        %v703 = vmul.f32 %v702, %v701
        %v704 = vmul.f32 0.5, %v703
        %v705 = vsub.f32 1.5, %v704
        %v706 = vmul.f32 %v701, %v705
        %vm707 = vweird.f32 %v675
        %vm708 = vweird.f32 %v701
        %vm709 = vmor %vm707, %vm708
        %v710 = vsel %vm709, %v701, %v706
        %v711 = vrsqrt.pop %v676
        %v712 = vmul.f32 %v711, %v676
        %v713 = vmul.f32 %v712, %v711
        %v714 = vmul.f32 0.5, %v713
        %v715 = vsub.f32 1.5, %v714
        %v716 = vmul.f32 %v711, %v715
        %vm717 = vweird.f32 %v676
        %vm718 = vweird.f32 %v711
        %vm719 = vmor %vm717, %vm718
        %v720 = vsel %vm719, %v711, %v716
        %v721 = vrsqrt.pop %v677
        %v722 = vmul.f32 %v721, %v677
        %v723 = vmul.f32 %v722, %v721
        %v724 = vmul.f32 0.5, %v723
        %v725 = vsub.f32 1.5, %v724
        %v726 = vmul.f32 %v721, %v725
        %vm727 = vweird.f32 %v677
        %vm728 = vweird.f32 %v721
        %vm729 = vmor %vm727, %vm728
        %v730 = vsel %vm729, %v721, %v726
        %v731 = vrsqrt.pop %v678
        %v732 = vmul.f32 %v731, %v678
        %v733 = vmul.f32 %v732, %v731
        %v734 = vmul.f32 0.5, %v733
        %v735 = vsub.f32 1.5, %v734
        %v736 = vmul.f32 %v731, %v735
        %vm737 = vweird.f32 %v678
        %vm738 = vweird.f32 %v731
        %vm739 = vmor %vm737, %vm738
        %v740 = vsel %vm739, %v731, %v736
        %v741 = vrsqrt.pop %v679
        %v742 = vmul.f32 %v741, %v679
        %v743 = vmul.f32 %v742, %v741
        %v744 = vmul.f32 0.5, %v743
        %v745 = vsub.f32 1.5, %v744
        %v746 = vmul.f32 %v741, %v745
        %vm747 = vweird.f32 %v679
        %vm748 = vweird.f32 %v741
        %vm749 = vmor %vm747, %vm748
        %v750 = vsel %vm749, %v741, %v746
        %v751 = vrsqrt.pop %v680
        %v752 = vmul.f32 %v751, %v680
        %v753 = vmul.f32 %v752, %v751
        %v754 = vmul.f32 0.5, %v753
        %v755 = vsub.f32 1.5, %v754
        %v756 = vmul.f32 %v751, %v755
        %vm757 = vweird.f32 %v680
        %vm758 = vweird.f32 %v751
        %vm759 = vmor %vm757, %vm758
        %v760 = vsel %vm759, %v751, %v756
        %v761 = vmul.f32 %v625, %v690
        %v762 = vmul.f32 %v626, %v700
        %v763 = vmul.f32 %v627, %v710
        %v764 = vmul.f32 %v628, %v720
        %v765 = vmul.f32 %v629, %v730
        %v766 = vmul.f32 %v630, %v740
        %v767 = vmul.f32 %v631, %v750
        %v768 = vmul.f32 %v632, %v760
        %v769 = vld [vmem:[%s1] sm:$0x1]
        %v771 = vperm.slane %v769, 0
        %v773 = vmul.f32 %v761, %v771
        %v774 = vmul.f32 %v762, %v771
        %v775 = vmul.f32 %v763, %v771
        %v776 = vmul.f32 %v764, %v771
        %v777 = vmul.f32 %v765, %v771
        %v778 = vmul.f32 %v766, %v771
        %v779 = vmul.f32 %v767, %v771
        %v780 = vmul.f32 %v768, %v771
        %v781 = vld [vmem:[%s2] sm:$0x1]
        %v783 = vperm.slane %v781, 0
        %v785 = vadd.f32 %v773, %v783
        %v786 = vadd.f32 %v774, %v783
        %v787 = vadd.f32 %v775, %v783
        %v788 = vadd.f32 %v776, %v783
        %v789 = vadd.f32 %v777, %v783
        %v790 = vadd.f32 %v778, %v783
        %v791 = vadd.f32 %v779, %v783
        %v792 = vadd.f32 %v780, %v783
        %v793 = vpack.c.bf16 %v785, %v785
        %v794 = vpack.c.bf16 %v786, %v786
        %v795 = vpack.c.bf16 %v787, %v787
        %v796 = vpack.c.bf16 %v788, %v788
        %v797 = vpack.c.bf16 %v789, %v789
        %v798 = vpack.c.bf16 %v790, %v790
        %v799 = vpack.c.bf16 %v791, %v791
        %v800 = vpack.c.bf16 %v792, %v792
        %vm801 = vcmask 257024
        %802 = vst.msk [vmem:[#allocation4] sm:$0xf] %vm801, %v793
        %803 = vst.msk [vmem:[#allocation4 + $0x4] sm:$0xf] %vm801, %v794
        %804 = vst.msk [vmem:[#allocation4 + $0x8] sm:$0xf] %vm801, %v795
        %805 = vst.msk [vmem:[#allocation4 + $0xc] sm:$0xf] %vm801, %v796
        %806 = vst.msk [vmem:[#allocation4 + $0x10] sm:$0xf] %vm801, %v797
        %807 = vst.msk [vmem:[#allocation4 + $0x14] sm:$0xf] %vm801, %v798
        %808 = vst.msk [vmem:[#allocation4 + $0x18] sm:$0xf] %vm801, %v799
        %809 = vst.msk [vmem:[#allocation4 + $0x1c] sm:$0xf] %vm801, %v800
        %v810 = vld [vmem:[%s5] sm:$0xf]
        %v811 = vld [vmem:[%s5 + $0x4] sm:$0xf]
        %v812 = vld [vmem:[%s5 + $0x8] sm:$0xf]
        %v813 = vld [vmem:[%s5 + $0xc] sm:$0xf]
        %v814 = vld [vmem:[%s6] sm:$0x1]
        %v816 = vperm.slane %v814, 0
        %v826 = vunpack.c.l.b16 %v793
        %v827 = vunpack.c.l.b16 %v794
        %v828 = vunpack.c.l.b16 %v795
        %v829 = vunpack.c.l.b16 %v796
        %v830 = vunpack.c.l.b16 %v797
        %v831 = vunpack.c.l.b16 %v798
        %v832 = vunpack.c.l.b16 %v799
        %v833 = vunpack.c.l.b16 %v800
        %v834 = vpack.c.b16 %v827, %v826
        %v835 = vpack.c.b16 %v829, %v828
        %v836 = vpack.c.b16 %v831, %v830
        %v837 = vpack.c.b16 %v833, %v832
        %v842 = vunpack.c.l.b16 %v810
        %v843 = vunpack.c.l.b16 %v811
        %v844 = vunpack.c.l.b16 %v812
        %v845 = vunpack.c.l.b16 %v813
        %v846 = vpack.c.b16 %v843, %v842
        %v847 = vpack.c.b16 %v845, %v844
        %v851 = vsel %vm585, %v834, 0
        %v854 = vsel %vm585, %v835, 0
        %v857 = vsel %vm585, %v836, 0
        %v860 = vsel %vm585, %v837, 0
        %862 = vmatpush.bf16.msra.mxu0 0
        %863 = vmatpush.bf16.msra.mxu0 0
        %864 = vmatpush.bf16.msra.mxu0 0
        %865 = vmatpush.bf16.msra.mxu0 0
        %866 = vmatpush.bf16.msra.mxu0 0
        %867 = vmatpush.bf16.msra.mxu0 0
        %868 = vmatpush.bf16.msra.mxu0 %v847
        %869 = vmatpush.bf16.msra.mxu0 %v846
        %870 = vmatmul.bf16.gmra.mxu0 %v851
        %v871 = vpop.f32.mrf.mxu0
        %v872 = vadd.f32 %v816, %v871
        %v873 = vpop.f32.mrf.mxu0
        %v874 = vadd.f32 %v816, %v873
        %875 = vmatmul.bf16.gmra.mxu0 %v854
        %v876 = vpop.f32.mrf.mxu0
        %v877 = vadd.f32 %v816, %v876
        %v878 = vpop.f32.mrf.mxu0
        %v879 = vadd.f32 %v816, %v878
        %880 = vmatmul.bf16.gmra.mxu0 %v857
        %v881 = vpop.f32.mrf.mxu0
        %v882 = vadd.f32 %v816, %v881
        %v883 = vpop.f32.mrf.mxu0
        %v884 = vadd.f32 %v816, %v883
        %885 = vmatmul.bf16.gmra.mxu0 %v860
        %v886 = vpop.f32.mrf.mxu0
        %v887 = vadd.f32 %v816, %v886
        %v888 = vpop.f32.mrf.mxu0
        %v889 = vadd.f32 %v816, %v888
        %890 = vdwg.mxu0
        %v891 = vld [vmem:[%s7] sm:$0xf]
        %v892 = vld [vmem:[%s7 + $0x4] sm:$0xf]
        %v893 = vld [vmem:[%s7 + $0x8] sm:$0xf]
        %v894 = vld [vmem:[%s7 + $0xc] sm:$0xf]
        %v895 = vld [vmem:[%s8] sm:$0x1]
        %v897 = vperm.slane %v895, 0
        %v903 = vunpack.c.l.b16 %v891
        %v904 = vunpack.c.l.b16 %v892
        %v905 = vunpack.c.l.b16 %v893
        %v906 = vunpack.c.l.b16 %v894
        %v907 = vpack.c.b16 %v904, %v903
        %v908 = vpack.c.b16 %v906, %v905
        %911 = vmatpush.bf16.msra.mxu0 0
        %912 = vmatpush.bf16.msra.mxu0 0
        %913 = vmatpush.bf16.msra.mxu0 0
        %914 = vmatpush.bf16.msra.mxu0 0
        %915 = vmatpush.bf16.msra.mxu0 0
        %916 = vmatpush.bf16.msra.mxu0 0
        %917 = vmatpush.bf16.msra.mxu0 %v908
        %918 = vmatpush.bf16.msra.mxu0 %v907
        %919 = vmatmul.bf16.gmra.mxu0 %v851
        %v920 = vpop.f32.mrf.mxu0
        %v921 = vadd.f32 %v897, %v920
        %v922 = vpop.f32.mrf.mxu0
        %v923 = vadd.f32 %v897, %v922
        %924 = vmatmul.bf16.gmra.mxu0 %v854
        %v925 = vpop.f32.mrf.mxu0
        %v926 = vadd.f32 %v897, %v925
        %v927 = vpop.f32.mrf.mxu0
        %v928 = vadd.f32 %v897, %v927
        %929 = vmatmul.bf16.gmra.mxu0 %v857
        %v930 = vpop.f32.mrf.mxu0
        %v931 = vadd.f32 %v897, %v930
        %v932 = vpop.f32.mrf.mxu0
        %v933 = vadd.f32 %v897, %v932
        %934 = vmatmul.bf16.gmra.mxu0 %v860
        %v935 = vpop.f32.mrf.mxu0
        %v936 = vadd.f32 %v897, %v935
        %v937 = vpop.f32.mrf.mxu0
        %v938 = vadd.f32 %v897, %v937
        %939 = vdwg.mxu0
        %v940 = vpack.c.bf16 %v872, %v872
        %v941 = vpack.c.bf16 %v874, %v874
        %v942 = vpack.c.bf16 %v877, %v877
        %v943 = vpack.c.bf16 %v879, %v879
        %v944 = vpack.c.bf16 %v882, %v882
        %v945 = vpack.c.bf16 %v884, %v884
        %v946 = vpack.c.bf16 %v887, %v887
        %v947 = vpack.c.bf16 %v889, %v889
        %956 = vrot.lane.b32.xlu0 %v940, 120
        %v957 = vpop.permute.xlu0 %956
        %958 = vrot.lane.b32.xlu0 %v941, 120
        %v959 = vpop.permute.xlu0 %958
        %960 = vrot.lane.b32.xlu0 %v942, 120
        %v961 = vpop.permute.xlu0 %960
        %962 = vrot.lane.b32.xlu0 %v943, 120
        %v963 = vpop.permute.xlu0 %962
        %964 = vrot.lane.b32.xlu0 %v944, 120
        %v965 = vpop.permute.xlu0 %964
        %966 = vrot.lane.b32.xlu0 %v945, 120
        %v967 = vpop.permute.xlu0 %966
        %968 = vrot.lane.b32.xlu0 %v946, 120
        %v969 = vpop.permute.xlu0 %968
        %970 = vrot.lane.b32.xlu0 %v947, 120
        %v971 = vpop.permute.xlu0 %970
        %980 = vrot.lane.b32.xlu0 %v940, 112
        %v981 = vpop.permute.xlu0 %980
        %982 = vrot.lane.b32.xlu0 %v941, 112
        %v983 = vpop.permute.xlu0 %982
        %984 = vrot.lane.b32.xlu0 %v942, 112
        %v985 = vpop.permute.xlu0 %984
        %986 = vrot.lane.b32.xlu0 %v943, 112
        %v987 = vpop.permute.xlu0 %986
        %988 = vrot.lane.b32.xlu0 %v944, 112
        %v989 = vpop.permute.xlu0 %988
        %990 = vrot.lane.b32.xlu0 %v945, 112
        %v991 = vpop.permute.xlu0 %990
        %992 = vrot.lane.b32.xlu0 %v946, 112
        %v993 = vpop.permute.xlu0 %992
        %994 = vrot.lane.b32.xlu0 %v947, 112
        %v995 = vpop.permute.xlu0 %994
        %1004 = vrot.lane.b32.xlu0 %v940, 104
        %v1005 = vpop.permute.xlu0 %1004
        %1006 = vrot.lane.b32.xlu0 %v941, 104
        %v1007 = vpop.permute.xlu0 %1006
        %1008 = vrot.lane.b32.xlu0 %v942, 104
        %v1009 = vpop.permute.xlu0 %1008
        %1010 = vrot.lane.b32.xlu0 %v943, 104
        %v1011 = vpop.permute.xlu0 %1010
        %1012 = vrot.lane.b32.xlu0 %v944, 104
        %v1013 = vpop.permute.xlu0 %1012
        %1014 = vrot.lane.b32.xlu0 %v945, 104
        %v1015 = vpop.permute.xlu0 %1014
        %1016 = vrot.lane.b32.xlu0 %v946, 104
        %v1017 = vpop.permute.xlu0 %1016
        %1018 = vrot.lane.b32.xlu0 %v947, 104
        %v1019 = vpop.permute.xlu0 %1018
        %vm1028 = vcmask 60416
        %1029 = vst.msk [vmem:[#allocation2] sm:$0xf] %vm1028, %v940
        %1030 = vst.msk [vmem:[#allocation2 + $0x4] sm:$0xf] %vm1028, %v941
        %1031 = vst.msk [vmem:[#allocation2 + $0x8] sm:$0xf] %vm1028, %v942
        %1032 = vst.msk [vmem:[#allocation2 + $0xc] sm:$0xf] %vm1028, %v943
        %1033 = vst.msk [vmem:[#allocation2 + $0x10] sm:$0xf] %vm1028, %v944
        %1034 = vst.msk [vmem:[#allocation2 + $0x14] sm:$0xf] %vm1028, %v945
        %1035 = vst.msk [vmem:[#allocation2 + $0x18] sm:$0xf] %vm1028, %v946
        %1036 = vst.msk [vmem:[#allocation2 + $0x1c] sm:$0xf] %vm1028, %v947
        %1037 = vst.msk [vmem:[#allocation2 + $0x20] sm:$0xf] %vm1028, %v957
        %1038 = vst.msk [vmem:[#allocation2 + $0x24] sm:$0xf] %vm1028, %v959
        %1039 = vst.msk [vmem:[#allocation2 + $0x28] sm:$0xf] %vm1028, %v961
        %1040 = vst.msk [vmem:[#allocation2 + $0x2c] sm:$0xf] %vm1028, %v963
        %1041 = vst.msk [vmem:[#allocation2 + $0x30] sm:$0xf] %vm1028, %v965
        %1042 = vst.msk [vmem:[#allocation2 + $0x34] sm:$0xf] %vm1028, %v967
        %1043 = vst.msk [vmem:[#allocation2 + $0x38] sm:$0xf] %vm1028, %v969
        %1044 = vst.msk [vmem:[#allocation2 + $0x3c] sm:$0xf] %vm1028, %v971
        %1045 = vst.msk [vmem:[#allocation2 + $0x40] sm:$0xf] %vm1028, %v981
        %1046 = vst.msk [vmem:[#allocation2 + $0x44] sm:$0xf] %vm1028, %v983
        %1047 = vst.msk [vmem:[#allocation2 + $0x48] sm:$0xf] %vm1028, %v985
        %1048 = vst.msk [vmem:[#allocation2 + $0x4c] sm:$0xf] %vm1028, %v987
        %1049 = vst.msk [vmem:[#allocation2 + $0x50] sm:$0xf] %vm1028, %v989
        %1050 = vst.msk [vmem:[#allocation2 + $0x54] sm:$0xf] %vm1028, %v991
        %1051 = vst.msk [vmem:[#allocation2 + $0x58] sm:$0xf] %vm1028, %v993
        %1052 = vst.msk [vmem:[#allocation2 + $0x5c] sm:$0xf] %vm1028, %v995
        %1053 = vst.msk [vmem:[#allocation2 + $0x60] sm:$0xf] %vm1028, %v1005
        %1054 = vst.msk [vmem:[#allocation2 + $0x64] sm:$0xf] %vm1028, %v1007
        %1055 = vst.msk [vmem:[#allocation2 + $0x68] sm:$0xf] %vm1028, %v1009
        %1056 = vst.msk [vmem:[#allocation2 + $0x6c] sm:$0xf] %vm1028, %v1011
        %1057 = vst.msk [vmem:[#allocation2 + $0x70] sm:$0xf] %vm1028, %v1013
        %1058 = vst.msk [vmem:[#allocation2 + $0x74] sm:$0xf] %vm1028, %v1015
        %1059 = vst.msk [vmem:[#allocation2 + $0x78] sm:$0xf] %vm1028, %v1017
        %1060 = vst.msk [vmem:[#allocation2 + $0x7c] sm:$0xf] %vm1028, %v1019
        %v1061 = vpack.c.bf16 %v921, %v921
        %v1062 = vpack.c.bf16 %v923, %v923
        %v1063 = vpack.c.bf16 %v926, %v926
        %v1064 = vpack.c.bf16 %v928, %v928
        %v1065 = vpack.c.bf16 %v931, %v931
        %v1066 = vpack.c.bf16 %v933, %v933
        %v1067 = vpack.c.bf16 %v936, %v936
        %v1068 = vpack.c.bf16 %v938, %v938
        %1077 = vrot.lane.b32.xlu0 %v1061, 120
        %v1078 = vpop.permute.xlu0 %1077
        %1079 = vrot.lane.b32.xlu0 %v1062, 120
        %v1080 = vpop.permute.xlu0 %1079
        %1081 = vrot.lane.b32.xlu0 %v1063, 120
        %v1082 = vpop.permute.xlu0 %1081
        %1083 = vrot.lane.b32.xlu0 %v1064, 120
        %v1084 = vpop.permute.xlu0 %1083
        %1085 = vrot.lane.b32.xlu0 %v1065, 120
        %v1086 = vpop.permute.xlu0 %1085
        %1087 = vrot.lane.b32.xlu0 %v1066, 120
        %v1088 = vpop.permute.xlu0 %1087
        %1089 = vrot.lane.b32.xlu0 %v1067, 120
        %v1090 = vpop.permute.xlu0 %1089
        %1091 = vrot.lane.b32.xlu0 %v1068, 120
        %v1092 = vpop.permute.xlu0 %1091
        %1101 = vrot.lane.b32.xlu0 %v1061, 112
        %v1102 = vpop.permute.xlu0 %1101
        %1103 = vrot.lane.b32.xlu0 %v1062, 112
        %v1104 = vpop.permute.xlu0 %1103
        %1105 = vrot.lane.b32.xlu0 %v1063, 112
        %v1106 = vpop.permute.xlu0 %1105
        %1107 = vrot.lane.b32.xlu0 %v1064, 112
        %v1108 = vpop.permute.xlu0 %1107
        %1109 = vrot.lane.b32.xlu0 %v1065, 112
        %v1110 = vpop.permute.xlu0 %1109
        %1111 = vrot.lane.b32.xlu0 %v1066, 112
        %v1112 = vpop.permute.xlu0 %1111
        %1113 = vrot.lane.b32.xlu0 %v1067, 112
        %v1114 = vpop.permute.xlu0 %1113
        %1115 = vrot.lane.b32.xlu0 %v1068, 112
        %v1116 = vpop.permute.xlu0 %1115
        %1125 = vrot.lane.b32.xlu0 %v1061, 104
        %v1126 = vpop.permute.xlu0 %1125
        %1127 = vrot.lane.b32.xlu0 %v1062, 104
        %v1128 = vpop.permute.xlu0 %1127
        %1129 = vrot.lane.b32.xlu0 %v1063, 104
        %v1130 = vpop.permute.xlu0 %1129
        %1131 = vrot.lane.b32.xlu0 %v1064, 104
        %v1132 = vpop.permute.xlu0 %1131
        %1133 = vrot.lane.b32.xlu0 %v1065, 104
        %v1134 = vpop.permute.xlu0 %1133
        %1135 = vrot.lane.b32.xlu0 %v1066, 104
        %v1136 = vpop.permute.xlu0 %1135
        %1137 = vrot.lane.b32.xlu0 %v1067, 104
        %v1138 = vpop.permute.xlu0 %1137
        %1139 = vrot.lane.b32.xlu0 %v1068, 104
        %v1140 = vpop.permute.xlu0 %1139
        %1149 = vst.msk [vmem:[#allocation3] sm:$0xf] %vm1028, %v1061
        %1150 = vst.msk [vmem:[#allocation3 + $0x4] sm:$0xf] %vm1028, %v1062
        %1151 = vst.msk [vmem:[#allocation3 + $0x8] sm:$0xf] %vm1028, %v1063
        %1152 = vst.msk [vmem:[#allocation3 + $0xc] sm:$0xf] %vm1028, %v1064
        %1153 = vst.msk [vmem:[#allocation3 + $0x10] sm:$0xf] %vm1028, %v1065
        %1154 = vst.msk [vmem:[#allocation3 + $0x14] sm:$0xf] %vm1028, %v1066
        %1155 = vst.msk [vmem:[#allocation3 + $0x18] sm:$0xf] %vm1028, %v1067
        %1156 = vst.msk [vmem:[#allocation3 + $0x1c] sm:$0xf] %vm1028, %v1068
        %1157 = vst.msk [vmem:[#allocation3 + $0x20] sm:$0xf] %vm1028, %v1078
        %1158 = vst.msk [vmem:[#allocation3 + $0x24] sm:$0xf] %vm1028, %v1080
        %1159 = vst.msk [vmem:[#allocation3 + $0x28] sm:$0xf] %vm1028, %v1082
        %1160 = vst.msk [vmem:[#allocation3 + $0x2c] sm:$0xf] %vm1028, %v1084
        %1161 = vst.msk [vmem:[#allocation3 + $0x30] sm:$0xf] %vm1028, %v1086
        %1162 = vst.msk [vmem:[#allocation3 + $0x34] sm:$0xf] %vm1028, %v1088
        %1163 = vst.msk [vmem:[#allocation3 + $0x38] sm:$0xf] %vm1028, %v1090
        %1164 = vst.msk [vmem:[#allocation3 + $0x3c] sm:$0xf] %vm1028, %v1092
        %1165 = vst.msk [vmem:[#allocation3 + $0x40] sm:$0xf] %vm1028, %v1102
        %1166 = vst.msk [vmem:[#allocation3 + $0x44] sm:$0xf] %vm1028, %v1104
        %1167 = vst.msk [vmem:[#allocation3 + $0x48] sm:$0xf] %vm1028, %v1106
        %1168 = vst.msk [vmem:[#allocation3 + $0x4c] sm:$0xf] %vm1028, %v1108
        %1169 = vst.msk [vmem:[#allocation3 + $0x50] sm:$0xf] %vm1028, %v1110
        %1170 = vst.msk [vmem:[#allocation3 + $0x54] sm:$0xf] %vm1028, %v1112
        %1171 = vst.msk [vmem:[#allocation3 + $0x58] sm:$0xf] %vm1028, %v1114
        %1172 = vst.msk [vmem:[#allocation3 + $0x5c] sm:$0xf] %vm1028, %v1116
        %1173 = vst.msk [vmem:[#allocation3 + $0x60] sm:$0xf] %vm1028, %v1126
        %1174 = vst.msk [vmem:[#allocation3 + $0x64] sm:$0xf] %vm1028, %v1128
        %1175 = vst.msk [vmem:[#allocation3 + $0x68] sm:$0xf] %vm1028, %v1130
        %1176 = vst.msk [vmem:[#allocation3 + $0x6c] sm:$0xf] %vm1028, %v1132
        %1177 = vst.msk [vmem:[#allocation3 + $0x70] sm:$0xf] %vm1028, %v1134
        %1178 = vst.msk [vmem:[#allocation3 + $0x74] sm:$0xf] %vm1028, %v1136
        %1179 = vst.msk [vmem:[#allocation3 + $0x78] sm:$0xf] %vm1028, %v1138
        %1180 = vst.msk [vmem:[#allocation3 + $0x7c] sm:$0xf] %vm1028, %v1140
      $region92: #{lit_layer_forward.2} parent=87 // pred_fallthru
        _
      %s1181 = smul.u32 %s33, 32
      %s1182 = scalar_lea.vmem %s561, %s1181
      %v1183 = vld [vmem:[%s1182] sm:$0xff]
      %v1184 = vld [vmem:[%s1182 + $0x8] sm:$0xff]
      %v1185 = vld [vmem:[%s1182 + $0x10] sm:$0xff]
      %v1186 = vld [vmem:[%s1182 + $0x18] sm:$0xff]
      %s1187 = sshra.s32 %s1181, 3
      %s1188 = sand.u32 %s1181, 7
      %s1189 = smul.addr %s1187, 4
      %s1190 = scalar_lea.vmem [#allocation4], %s1189
      %v1191 = vld [vmem:[%s1190] sm:$0xf]
      %v1192 = vld [vmem:[%s1190 + $0x4] sm:$0xf]
      %v1193 = vld [vmem:[%s1190 + $0x8] sm:$0xf]
      %v1194 = vld [vmem:[%s1190 + $0xc] sm:$0xf]
      %v1195 = vld [vmem:[%s3] sm:$0xf]
      %v1196 = vld [vmem:[%s3 + $0x4] sm:$0xf]
      %v1197 = vld [vmem:[%s3 + $0x8] sm:$0xf]
      %v1198 = vld [vmem:[%s3 + $0xc] sm:$0xf]
      %v1199 = vld [vmem:[%s4] sm:$0x1]
      %v1201 = vperm.slane %v1199, 0
      %v1207 = vunpack.c.l.b16 %v1191
      %v1208 = vunpack.c.l.b16 %v1192
      %v1209 = vunpack.c.l.b16 %v1193
      %v1210 = vunpack.c.l.b16 %v1194
      %v1211 = vpack.c.b16 %v1208, %v1207
      %v1212 = vpack.c.b16 %v1210, %v1209
      %v1217 = vunpack.c.l.b16 %v1195
      %v1218 = vunpack.c.l.b16 %v1196
      %v1219 = vunpack.c.l.b16 %v1197
      %v1220 = vunpack.c.l.b16 %v1198
      %v1221 = vpack.c.b16 %v1218, %v1217
      %v1222 = vpack.c.b16 %v1220, %v1219
      %vm1225 = vcmask 261120
      %v1227 = vsel %vm1225, %v1211, 0
      %v1230 = vsel %vm1225, %v1212, 0
      %1232 = vmatpush.bf16.msra.mxu0 0
      %1233 = vmatpush.bf16.msra.mxu0 0
      %1234 = vmatpush.bf16.msra.mxu0 0
      %1235 = vmatpush.bf16.msra.mxu0 0
      %1236 = vmatpush.bf16.msra.mxu0 0
      %1237 = vmatpush.bf16.msra.mxu0 0
      %1238 = vmatpush.bf16.msra.mxu0 %v1222
      %1239 = vmatpush.bf16.msra.mxu0 %v1221
      %1240 = vmatmul.bf16.gmra.mxu0 %v1227
      %v1241 = vpop.f32.mrf.mxu0
      %v1242 = vadd.f32 %v1201, %v1241
      %v1243 = vpop.f32.mrf.mxu0
      %v1244 = vadd.f32 %v1201, %v1243
      %1245 = vmatmul.bf16.gmra.mxu0 %v1230
      %v1246 = vpop.f32.mrf.mxu0
      %v1247 = vadd.f32 %v1201, %v1246
      %v1248 = vpop.f32.mrf.mxu0
      %v1249 = vadd.f32 %v1201, %v1248
      %1250 = vdwg.mxu0
      %v1251 = vpack.c.bf16 %v1242, %v1242
      %v1252 = vpack.c.bf16 %v1244, %v1244
      %v1253 = vpack.c.bf16 %v1247, %v1247
      %v1254 = vpack.c.bf16 %v1249, %v1249
      %1259 = vrot.lane.b32.xlu0 %v1251, 120
      %v1260 = vpop.permute.xlu0 %1259
      %1261 = vrot.lane.b32.xlu0 %v1252, 120
      %v1262 = vpop.permute.xlu0 %1261
      %1263 = vrot.lane.b32.xlu0 %v1253, 120
      %v1264 = vpop.permute.xlu0 %1263
      %1265 = vrot.lane.b32.xlu0 %v1254, 120
      %v1266 = vpop.permute.xlu0 %1265
      %1267 = vrot.lane.b32.xlu0 %v1251, 112
      %v1268 = vpop.permute.xlu0 %1267
      %1269 = vrot.lane.b32.xlu0 %v1252, 112
      %v1270 = vpop.permute.xlu0 %1269
      %1271 = vrot.lane.b32.xlu0 %v1253, 112
      %v1272 = vpop.permute.xlu0 %1271
      %1273 = vrot.lane.b32.xlu0 %v1254, 112
      %v1274 = vpop.permute.xlu0 %1273
      %1275 = vrot.lane.b32.xlu0 %v1251, 104
      %v1276 = vpop.permute.xlu0 %1275
      %1277 = vrot.lane.b32.xlu0 %v1252, 104
      %v1278 = vpop.permute.xlu0 %1277
      %1279 = vrot.lane.b32.xlu0 %v1253, 104
      %v1280 = vpop.permute.xlu0 %1279
      %1281 = vrot.lane.b32.xlu0 %v1254, 104
      %v1282 = vpop.permute.xlu0 %1281
      %v1283 = vld [vmem:[#allocation2] sm:$0xf]
      %v1284 = vld [vmem:[#allocation2 + $0x4] sm:$0xf]
      %v1285 = vld [vmem:[#allocation2 + $0x8] sm:$0xf]
      %v1286 = vld [vmem:[#allocation2 + $0xc] sm:$0xf]
      %v1287 = vld [vmem:[#allocation2 + $0x10] sm:$0xf]
      %v1288 = vld [vmem:[#allocation2 + $0x14] sm:$0xf]
      %v1289 = vld [vmem:[#allocation2 + $0x18] sm:$0xf]
      %v1290 = vld [vmem:[#allocation2 + $0x1c] sm:$0xf]
      %v1291 = vld [vmem:[#allocation2 + $0x20] sm:$0xf]
      %v1292 = vld [vmem:[#allocation2 + $0x24] sm:$0xf]
      %v1293 = vld [vmem:[#allocation2 + $0x28] sm:$0xf]
      %v1294 = vld [vmem:[#allocation2 + $0x2c] sm:$0xf]
      %v1295 = vld [vmem:[#allocation2 + $0x30] sm:$0xf]
      %v1296 = vld [vmem:[#allocation2 + $0x34] sm:$0xf]
      %v1297 = vld [vmem:[#allocation2 + $0x38] sm:$0xf]
      %v1298 = vld [vmem:[#allocation2 + $0x3c] sm:$0xf]
      %v1299 = vld [vmem:[#allocation2 + $0x40] sm:$0xf]
      %v1300 = vld [vmem:[#allocation2 + $0x44] sm:$0xf]
      %v1301 = vld [vmem:[#allocation2 + $0x48] sm:$0xf]
      %v1302 = vld [vmem:[#allocation2 + $0x4c] sm:$0xf]
      %v1303 = vld [vmem:[#allocation2 + $0x50] sm:$0xf]
      %v1304 = vld [vmem:[#allocation2 + $0x54] sm:$0xf]
      %v1305 = vld [vmem:[#allocation2 + $0x58] sm:$0xf]
      %v1306 = vld [vmem:[#allocation2 + $0x5c] sm:$0xf]
      %v1307 = vld [vmem:[#allocation2 + $0x60] sm:$0xf]
      %v1308 = vld [vmem:[#allocation2 + $0x64] sm:$0xf]
      %v1309 = vld [vmem:[#allocation2 + $0x68] sm:$0xf]
      %v1310 = vld [vmem:[#allocation2 + $0x6c] sm:$0xf]
      %v1311 = vld [vmem:[#allocation2 + $0x70] sm:$0xf]
      %v1312 = vld [vmem:[#allocation2 + $0x74] sm:$0xf]
      %v1313 = vld [vmem:[#allocation2 + $0x78] sm:$0xf]
      %v1314 = vld [vmem:[#allocation2 + $0x7c] sm:$0xf]
      %v1315 = vunpack.c.l.b16 %v1251
      %v1316 = vunpack.c.l.b16 %v1252
      %v1317 = vunpack.c.l.b16 %v1253
      %v1318 = vunpack.c.l.b16 %v1254
      %v1319 = vpack.c.b16 %v1316, %v1315
      %v1320 = vpack.c.b16 %v1318, %v1317
      %v1329 = vunpack.c.l.b16 %v1283
      %v1330 = vunpack.c.l.b16 %v1284
      %v1331 = vunpack.c.l.b16 %v1285
      %v1332 = vunpack.c.l.b16 %v1286
      %v1333 = vunpack.c.l.b16 %v1287
      %v1334 = vunpack.c.l.b16 %v1288
      %v1335 = vunpack.c.l.b16 %v1289
      %v1336 = vunpack.c.l.b16 %v1290
      %v1337 = vpack.c.b16 %v1330, %v1329
      %v1338 = vpack.c.b16 %v1332, %v1331
      %v1339 = vpack.c.b16 %v1334, %v1333
      %v1340 = vpack.c.b16 %v1336, %v1335
      %vm1341 = vcmask 64512
      %v1343 = vsel %vm1341, %v1319, 0
      %v1346 = vsel %vm1341, %v1320, 0
      %v1349 = vsel %vm1341, %v1337, 0
      %v1352 = vsel %vm1341, %v1338, 0
      %v1355 = vsel %vm1341, %v1339, 0
      %v1358 = vsel %vm1341, %v1340, 0
      %1360 = vmatpush.bf16.xpose.msra.mxu0 0
      %1361 = vmatpush.bf16.xpose.msra.mxu0 0
      %1362 = vmatpush.bf16.xpose.msra.mxu0 0
      %1363 = vmatpush.bf16.xpose.msra.mxu0 0
      %1364 = vmatpush.bf16.xpose.msra.mxu0 %v1358
      %1365 = vmatpush.bf16.xpose.msra.mxu0 %v1355
      %1366 = vmatpush.bf16.xpose.msra.mxu0 %v1352
      %1367 = vmatpush.bf16.xpose.msra.mxu0 %v1349
      %1368 = vmatmul.bf16.gmra.mxu0 %v1343
      %v1369 = vpop.f32.mrf.mxu0
      %v1370 = vadd.f32 0.0, %v1369
      %v1371 = vpop.f32.mrf.mxu0
      %v1372 = vadd.f32 0.0, %v1371
      %1373 = vmatmul.bf16.gmra.mxu0 %v1346
      %v1374 = vpop.f32.mrf.mxu0
      %v1375 = vadd.f32 0.0, %v1374
      %v1376 = vpop.f32.mrf.mxu0
      %v1377 = vadd.f32 0.0, %v1376
      %1378 = vdwg.mxu0
      %v1379 = vunpack.c.l.b16 %v1260
      %v1380 = vunpack.c.l.b16 %v1262
      %v1381 = vunpack.c.l.b16 %v1264
      %v1382 = vunpack.c.l.b16 %v1266
      %v1383 = vpack.c.b16 %v1380, %v1379
      %v1384 = vpack.c.b16 %v1382, %v1381
      %v1393 = vunpack.c.l.b16 %v1291
      %v1394 = vunpack.c.l.b16 %v1292
      %v1395 = vunpack.c.l.b16 %v1293
      %v1396 = vunpack.c.l.b16 %v1294
      %v1397 = vunpack.c.l.b16 %v1295
      %v1398 = vunpack.c.l.b16 %v1296
      %v1399 = vunpack.c.l.b16 %v1297
      %v1400 = vunpack.c.l.b16 %v1298
      %v1401 = vpack.c.b16 %v1394, %v1393
      %v1402 = vpack.c.b16 %v1396, %v1395
      %v1403 = vpack.c.b16 %v1398, %v1397
      %v1404 = vpack.c.b16 %v1400, %v1399
      %v1406 = vsel %vm1341, %v1383, 0
      %v1409 = vsel %vm1341, %v1384, 0
      %v1412 = vsel %vm1341, %v1401, 0
      %v1415 = vsel %vm1341, %v1402, 0
      %v1418 = vsel %vm1341, %v1403, 0
      %v1421 = vsel %vm1341, %v1404, 0
      %1423 = vmatpush.bf16.xpose.msra.mxu0 0
      %1424 = vmatpush.bf16.xpose.msra.mxu0 0
      %1425 = vmatpush.bf16.xpose.msra.mxu0 0
      %1426 = vmatpush.bf16.xpose.msra.mxu0 0
      %1427 = vmatpush.bf16.xpose.msra.mxu0 %v1421
      %1428 = vmatpush.bf16.xpose.msra.mxu0 %v1418
      %1429 = vmatpush.bf16.xpose.msra.mxu0 %v1415
      %1430 = vmatpush.bf16.xpose.msra.mxu0 %v1412
      %1431 = vmatmul.bf16.gmra.mxu0 %v1406
      %v1432 = vpop.f32.mrf.mxu0
      %v1433 = vadd.f32 0.0, %v1432
      %v1434 = vpop.f32.mrf.mxu0
      %v1435 = vadd.f32 0.0, %v1434
      %1436 = vmatmul.bf16.gmra.mxu0 %v1409
      %v1437 = vpop.f32.mrf.mxu0
      %v1438 = vadd.f32 0.0, %v1437
      %v1439 = vpop.f32.mrf.mxu0
      %v1440 = vadd.f32 0.0, %v1439
      %1441 = vdwg.mxu0
      %v1442 = vunpack.c.l.b16 %v1268
      %v1443 = vunpack.c.l.b16 %v1270
      %v1444 = vunpack.c.l.b16 %v1272
      %v1445 = vunpack.c.l.b16 %v1274
      %v1446 = vpack.c.b16 %v1443, %v1442
      %v1447 = vpack.c.b16 %v1445, %v1444
      %v1456 = vunpack.c.l.b16 %v1299
      %v1457 = vunpack.c.l.b16 %v1300
      %v1458 = vunpack.c.l.b16 %v1301
      %v1459 = vunpack.c.l.b16 %v1302
      %v1460 = vunpack.c.l.b16 %v1303
      %v1461 = vunpack.c.l.b16 %v1304
      %v1462 = vunpack.c.l.b16 %v1305
      %v1463 = vunpack.c.l.b16 %v1306
      %v1464 = vpack.c.b16 %v1457, %v1456
      %v1465 = vpack.c.b16 %v1459, %v1458
      %v1466 = vpack.c.b16 %v1461, %v1460
      %v1467 = vpack.c.b16 %v1463, %v1462
      %v1469 = vsel %vm1341, %v1446, 0
      %v1472 = vsel %vm1341, %v1447, 0
      %v1475 = vsel %vm1341, %v1464, 0
      %v1478 = vsel %vm1341, %v1465, 0
      %v1481 = vsel %vm1341, %v1466, 0
      %v1484 = vsel %vm1341, %v1467, 0
      %1486 = vmatpush.bf16.xpose.msra.mxu0 0
      %1487 = vmatpush.bf16.xpose.msra.mxu0 0
      %1488 = vmatpush.bf16.xpose.msra.mxu0 0
      %1489 = vmatpush.bf16.xpose.msra.mxu0 0
      %1490 = vmatpush.bf16.xpose.msra.mxu0 %v1484
      %1491 = vmatpush.bf16.xpose.msra.mxu0 %v1481
      %1492 = vmatpush.bf16.xpose.msra.mxu0 %v1478
      %1493 = vmatpush.bf16.xpose.msra.mxu0 %v1475
      %1494 = vmatmul.bf16.gmra.mxu0 %v1469
      %v1495 = vpop.f32.mrf.mxu0
      %v1496 = vadd.f32 0.0, %v1495
      %v1497 = vpop.f32.mrf.mxu0
      %v1498 = vadd.f32 0.0, %v1497
      %1499 = vmatmul.bf16.gmra.mxu0 %v1472
      %v1500 = vpop.f32.mrf.mxu0
      %v1501 = vadd.f32 0.0, %v1500
      %v1502 = vpop.f32.mrf.mxu0
      %v1503 = vadd.f32 0.0, %v1502
      %1504 = vdwg.mxu0
      %v1505 = vunpack.c.l.b16 %v1276
      %v1506 = vunpack.c.l.b16 %v1278
      %v1507 = vunpack.c.l.b16 %v1280
      %v1508 = vunpack.c.l.b16 %v1282
      %v1509 = vpack.c.b16 %v1506, %v1505
      %v1510 = vpack.c.b16 %v1508, %v1507
      %v1519 = vunpack.c.l.b16 %v1307
      %v1520 = vunpack.c.l.b16 %v1308
      %v1521 = vunpack.c.l.b16 %v1309
      %v1522 = vunpack.c.l.b16 %v1310
      %v1523 = vunpack.c.l.b16 %v1311
      %v1524 = vunpack.c.l.b16 %v1312
      %v1525 = vunpack.c.l.b16 %v1313
      %v1526 = vunpack.c.l.b16 %v1314
      %v1527 = vpack.c.b16 %v1520, %v1519
      %v1528 = vpack.c.b16 %v1522, %v1521
      %v1529 = vpack.c.b16 %v1524, %v1523
      %v1530 = vpack.c.b16 %v1526, %v1525
      %v1532 = vsel %vm1341, %v1509, 0
      %v1535 = vsel %vm1341, %v1510, 0
      %v1538 = vsel %vm1341, %v1527, 0
      %v1541 = vsel %vm1341, %v1528, 0
      %v1544 = vsel %vm1341, %v1529, 0
      %v1547 = vsel %vm1341, %v1530, 0
      %1549 = vmatpush.bf16.xpose.msra.mxu0 0
      %1550 = vmatpush.bf16.xpose.msra.mxu0 0
      %1551 = vmatpush.bf16.xpose.msra.mxu0 0
      %1552 = vmatpush.bf16.xpose.msra.mxu0 0
      %1553 = vmatpush.bf16.xpose.msra.mxu0 %v1547
      %1554 = vmatpush.bf16.xpose.msra.mxu0 %v1544
      %1555 = vmatpush.bf16.xpose.msra.mxu0 %v1541
      %1556 = vmatpush.bf16.xpose.msra.mxu0 %v1538
      %1557 = vmatmul.bf16.gmra.mxu0 %v1532
      %v1558 = vpop.f32.mrf.mxu0
      %v1559 = vadd.f32 0.0, %v1558
      %v1560 = vpop.f32.mrf.mxu0
      %v1561 = vadd.f32 0.0, %v1560
      %1562 = vmatmul.bf16.gmra.mxu0 %v1535
      %v1563 = vpop.f32.mrf.mxu0
      %v1564 = vadd.f32 0.0, %v1563
      %v1565 = vpop.f32.mrf.mxu0
      %v1566 = vadd.f32 0.0, %v1565
      %1567 = vdwg.mxu0
      %vm1568 = vcmask 523264
      %v1569 = vsel %vm1568, %v1370, -inf
      %1570 = vmax.xlane.f32.xlu0 %v1569
      %v1571 = vpop.xlane.xlu0 %1570
      %v1572 = vsel %vm1568, %v1372, -inf
      %1573 = vmax.xlane.f32.xlu0 %v1572
      %v1574 = vpop.xlane.xlu0 %1573
      %v1575 = vsel %vm1568, %v1375, -inf
      %1576 = vmax.xlane.f32.xlu0 %v1575
      %v1577 = vpop.xlane.xlu0 %1576
      %v1578 = vsel %vm1568, %v1377, -inf
      %1579 = vmax.xlane.f32.xlu0 %v1578
      %v1580 = vpop.xlane.xlu0 %1579
      %v1581 = vsel %vm1568, %v1433, -inf
      %1582 = vmax.xlane.f32.xlu0 %v1581
      %v1583 = vpop.xlane.xlu0 %1582
      %v1584 = vsel %vm1568, %v1435, -inf
      %1585 = vmax.xlane.f32.xlu0 %v1584
      %v1586 = vpop.xlane.xlu0 %1585
      %v1587 = vsel %vm1568, %v1438, -inf
      %1588 = vmax.xlane.f32.xlu0 %v1587
      %v1589 = vpop.xlane.xlu0 %1588
      %v1590 = vsel %vm1568, %v1440, -inf
      %1591 = vmax.xlane.f32.xlu0 %v1590
      %v1592 = vpop.xlane.xlu0 %1591
      %v1593 = vsel %vm1568, %v1496, -inf
      %1594 = vmax.xlane.f32.xlu0 %v1593
      %v1595 = vpop.xlane.xlu0 %1594
      %v1596 = vsel %vm1568, %v1498, -inf
      %1597 = vmax.xlane.f32.xlu0 %v1596
      %v1598 = vpop.xlane.xlu0 %1597
      %v1599 = vsel %vm1568, %v1501, -inf
      %1600 = vmax.xlane.f32.xlu0 %v1599
      %v1601 = vpop.xlane.xlu0 %1600
      %v1602 = vsel %vm1568, %v1503, -inf
      %1603 = vmax.xlane.f32.xlu0 %v1602
      %v1604 = vpop.xlane.xlu0 %1603
      %v1605 = vsel %vm1568, %v1559, -inf
      %1606 = vmax.xlane.f32.xlu0 %v1605
      %v1607 = vpop.xlane.xlu0 %1606
      %v1608 = vsel %vm1568, %v1561, -inf
      %1609 = vmax.xlane.f32.xlu0 %v1608
      %v1610 = vpop.xlane.xlu0 %1609
      %v1611 = vsel %vm1568, %v1564, -inf
      %1612 = vmax.xlane.f32.xlu0 %v1611
      %v1613 = vpop.xlane.xlu0 %1612
      %v1614 = vsel %vm1568, %v1566, -inf
      %1615 = vmax.xlane.f32.xlu0 %v1614
      %v1616 = vpop.xlane.xlu0 %1615
      %v1617 = vsub.f32 %v1370, %v1571
      %v1618 = vsub.f32 %v1372, %v1574
      %v1619 = vsub.f32 %v1375, %v1577
      %v1620 = vsub.f32 %v1377, %v1580
      %v1621 = vsub.f32 %v1433, %v1583
      %v1622 = vsub.f32 %v1435, %v1586
      %v1623 = vsub.f32 %v1438, %v1589
      %v1624 = vsub.f32 %v1440, %v1592
      %v1625 = vsub.f32 %v1496, %v1595
      %v1626 = vsub.f32 %v1498, %v1598
      %v1627 = vsub.f32 %v1501, %v1601
      %v1628 = vsub.f32 %v1503, %v1604
      %v1629 = vsub.f32 %v1559, %v1607
      %v1630 = vsub.f32 %v1561, %v1610
      %v1631 = vsub.f32 %v1564, %v1613
      %v1632 = vsub.f32 %v1566, %v1616
      %v1633 = vmul.f32 %v1617, 1.442695
      %v1634 = vpow.pop %v1633
      %v1635 = vmul.f32 %v1618, 1.442695
      %v1636 = vpow.pop %v1635
      %v1637 = vmul.f32 %v1619, 1.442695
      %v1638 = vpow.pop %v1637
      %v1639 = vmul.f32 %v1620, 1.442695
      %v1640 = vpow.pop %v1639
      %v1641 = vmul.f32 %v1621, 1.442695
      %v1642 = vpow.pop %v1641
      %v1643 = vmul.f32 %v1622, 1.442695
      %v1644 = vpow.pop %v1643
      %v1645 = vmul.f32 %v1623, 1.442695
      %v1646 = vpow.pop %v1645
      %v1647 = vmul.f32 %v1624, 1.442695
      %v1648 = vpow.pop %v1647
      %v1649 = vmul.f32 %v1625, 1.442695
      %v1650 = vpow.pop %v1649
      %v1651 = vmul.f32 %v1626, 1.442695
      %v1652 = vpow.pop %v1651
      %v1653 = vmul.f32 %v1627, 1.442695
      %v1654 = vpow.pop %v1653
      %v1655 = vmul.f32 %v1628, 1.442695
      %v1656 = vpow.pop %v1655
      %v1657 = vmul.f32 %v1629, 1.442695
      %v1658 = vpow.pop %v1657
      %v1659 = vmul.f32 %v1630, 1.442695
      %v1660 = vpow.pop %v1659
      %v1661 = vmul.f32 %v1631, 1.442695
      %v1662 = vpow.pop %v1661
      %v1663 = vmul.f32 %v1632, 1.442695
      %v1664 = vpow.pop %v1663
      %v1665 = vsel %vm1568, %v1634, 0.0
      %1666 = vadd.xlane.f32.xlu0 %v1665
      %v1667 = vpop.xlane.xlu0 %1666
      %v1668 = vsel %vm1568, %v1636, 0.0
      %1669 = vadd.xlane.f32.xlu0 %v1668
      %v1670 = vpop.xlane.xlu0 %1669
      %v1671 = vsel %vm1568, %v1638, 0.0
      %1672 = vadd.xlane.f32.xlu0 %v1671
      %v1673 = vpop.xlane.xlu0 %1672
      %v1674 = vsel %vm1568, %v1640, 0.0
      %1675 = vadd.xlane.f32.xlu0 %v1674
      %v1676 = vpop.xlane.xlu0 %1675
      %v1677 = vsel %vm1568, %v1642, 0.0
      %1678 = vadd.xlane.f32.xlu0 %v1677
      %v1679 = vpop.xlane.xlu0 %1678
      %v1680 = vsel %vm1568, %v1644, 0.0
      %1681 = vadd.xlane.f32.xlu0 %v1680
      %v1682 = vpop.xlane.xlu0 %1681
      %v1683 = vsel %vm1568, %v1646, 0.0
      %1684 = vadd.xlane.f32.xlu0 %v1683
      %v1685 = vpop.xlane.xlu0 %1684
      %v1686 = vsel %vm1568, %v1648, 0.0
      %1687 = vadd.xlane.f32.xlu0 %v1686
      %v1688 = vpop.xlane.xlu0 %1687
      %v1689 = vsel %vm1568, %v1650, 0.0
      %1690 = vadd.xlane.f32.xlu0 %v1689
      %v1691 = vpop.xlane.xlu0 %1690
      %v1692 = vsel %vm1568, %v1652, 0.0
      %1693 = vadd.xlane.f32.xlu0 %v1692
      %v1694 = vpop.xlane.xlu0 %1693
      %v1695 = vsel %vm1568, %v1654, 0.0
      %1696 = vadd.xlane.f32.xlu0 %v1695
      %v1697 = vpop.xlane.xlu0 %1696
      %v1698 = vsel %vm1568, %v1656, 0.0
      %1699 = vadd.xlane.f32.xlu0 %v1698
      %v1700 = vpop.xlane.xlu0 %1699
      %v1701 = vsel %vm1568, %v1658, 0.0
      %1702 = vadd.xlane.f32.xlu0 %v1701
      %v1703 = vpop.xlane.xlu0 %1702
      %v1704 = vsel %vm1568, %v1660, 0.0
      %1705 = vadd.xlane.f32.xlu0 %v1704
      %v1706 = vpop.xlane.xlu0 %1705
      %v1707 = vsel %vm1568, %v1662, 0.0
      %1708 = vadd.xlane.f32.xlu0 %v1707
      %v1709 = vpop.xlane.xlu0 %1708
      %v1710 = vsel %vm1568, %v1664, 0.0
      %1711 = vadd.xlane.f32.xlu0 %v1710
      %v1712 = vpop.xlane.xlu0 %1711
      %v1713 = vrcp.pop %v1667
      %v1714 = vrcp.pop %v1670
      %v1715 = vrcp.pop %v1673
      %v1716 = vrcp.pop %v1676
      %v1717 = vrcp.pop %v1679
      %v1718 = vrcp.pop %v1682
      %v1719 = vrcp.pop %v1685
      %v1720 = vrcp.pop %v1688
      %v1721 = vrcp.pop %v1691
      %v1722 = vrcp.pop %v1694
      %v1723 = vrcp.pop %v1697
      %v1724 = vrcp.pop %v1700
      %v1725 = vrcp.pop %v1703
      %v1726 = vrcp.pop %v1706
      %v1727 = vrcp.pop %v1709
      %v1728 = vrcp.pop %v1712
      %v1729 = vmul.f32 %v1634, %v1713
      %v1730 = vmul.f32 %v1636, %v1714
      %v1731 = vmul.f32 %v1638, %v1715
      %v1732 = vmul.f32 %v1640, %v1716
      %v1733 = vmul.f32 %v1642, %v1717
      %v1734 = vmul.f32 %v1644, %v1718
      %v1735 = vmul.f32 %v1646, %v1719
      %v1736 = vmul.f32 %v1648, %v1720
      %v1737 = vmul.f32 %v1650, %v1721
      %v1738 = vmul.f32 %v1652, %v1722
      %v1739 = vmul.f32 %v1654, %v1723
      %v1740 = vmul.f32 %v1656, %v1724
      %v1741 = vmul.f32 %v1658, %v1725
      %v1742 = vmul.f32 %v1660, %v1726
      %v1743 = vmul.f32 %v1662, %v1727
      %v1744 = vmul.f32 %v1664, %v1728
      %v1745 = vpack.c.bf16 %v1729, %v1729
      %v1746 = vpack.c.bf16 %v1730, %v1730
      %v1747 = vpack.c.bf16 %v1731, %v1731
      %v1748 = vpack.c.bf16 %v1732, %v1732
      %v1749 = vpack.c.bf16 %v1733, %v1733
      %v1750 = vpack.c.bf16 %v1734, %v1734
      %v1751 = vpack.c.bf16 %v1735, %v1735
      %v1752 = vpack.c.bf16 %v1736, %v1736
      %v1753 = vpack.c.bf16 %v1737, %v1737
      %v1754 = vpack.c.bf16 %v1738, %v1738
      %v1755 = vpack.c.bf16 %v1739, %v1739
      %v1756 = vpack.c.bf16 %v1740, %v1740
      %v1757 = vpack.c.bf16 %v1741, %v1741
      %v1758 = vpack.c.bf16 %v1742, %v1742
      %v1759 = vpack.c.bf16 %v1743, %v1743
      %v1760 = vpack.c.bf16 %v1744, %v1744
      %v1761 = vld [vmem:[#allocation3] sm:$0xf]
      %v1762 = vld [vmem:[#allocation3 + $0x4] sm:$0xf]
      %v1763 = vld [vmem:[#allocation3 + $0x8] sm:$0xf]
      %v1764 = vld [vmem:[#allocation3 + $0xc] sm:$0xf]
      %v1765 = vld [vmem:[#allocation3 + $0x10] sm:$0xf]
      %v1766 = vld [vmem:[#allocation3 + $0x14] sm:$0xf]
      %v1767 = vld [vmem:[#allocation3 + $0x18] sm:$0xf]
      %v1768 = vld [vmem:[#allocation3 + $0x1c] sm:$0xf]
      %v1769 = vld [vmem:[#allocation3 + $0x20] sm:$0xf]
      %v1770 = vld [vmem:[#allocation3 + $0x24] sm:$0xf]
      %v1771 = vld [vmem:[#allocation3 + $0x28] sm:$0xf]
      %v1772 = vld [vmem:[#allocation3 + $0x2c] sm:$0xf]
      %v1773 = vld [vmem:[#allocation3 + $0x30] sm:$0xf]
      %v1774 = vld [vmem:[#allocation3 + $0x34] sm:$0xf]
      %v1775 = vld [vmem:[#allocation3 + $0x38] sm:$0xf]
      %v1776 = vld [vmem:[#allocation3 + $0x3c] sm:$0xf]
      %v1777 = vld [vmem:[#allocation3 + $0x40] sm:$0xf]
      %v1778 = vld [vmem:[#allocation3 + $0x44] sm:$0xf]
      %v1779 = vld [vmem:[#allocation3 + $0x48] sm:$0xf]
      %v1780 = vld [vmem:[#allocation3 + $0x4c] sm:$0xf]
      %v1781 = vld [vmem:[#allocation3 + $0x50] sm:$0xf]
      %v1782 = vld [vmem:[#allocation3 + $0x54] sm:$0xf]
      %v1783 = vld [vmem:[#allocation3 + $0x58] sm:$0xf]
      %v1784 = vld [vmem:[#allocation3 + $0x5c] sm:$0xf]
      %v1785 = vld [vmem:[#allocation3 + $0x60] sm:$0xf]
      %v1786 = vld [vmem:[#allocation3 + $0x64] sm:$0xf]
      %v1787 = vld [vmem:[#allocation3 + $0x68] sm:$0xf]
      %v1788 = vld [vmem:[#allocation3 + $0x6c] sm:$0xf]
      %v1789 = vld [vmem:[#allocation3 + $0x70] sm:$0xf]
      %v1790 = vld [vmem:[#allocation3 + $0x74] sm:$0xf]
      %v1791 = vld [vmem:[#allocation3 + $0x78] sm:$0xf]
      %v1792 = vld [vmem:[#allocation3 + $0x7c] sm:$0xf]
      %v1797 = vunpack.c.l.b16 %v1745
      %v1798 = vunpack.c.l.b16 %v1746
      %v1799 = vunpack.c.l.b16 %v1747
      %v1800 = vunpack.c.l.b16 %v1748
      %v1801 = vpack.c.b16 %v1798, %v1797
      %v1802 = vpack.c.b16 %v1800, %v1799
      %v1811 = vunpack.c.l.b16 %v1761
      %v1812 = vunpack.c.l.b16 %v1762
      %v1813 = vunpack.c.l.b16 %v1763
      %v1814 = vunpack.c.l.b16 %v1764
      %v1815 = vunpack.c.l.b16 %v1765
      %v1816 = vunpack.c.l.b16 %v1766
      %v1817 = vunpack.c.l.b16 %v1767
      %v1818 = vunpack.c.l.b16 %v1768
      %v1819 = vpack.c.b16 %v1812, %v1811
      %v1820 = vpack.c.b16 %v1814, %v1813
      %v1821 = vpack.c.b16 %v1816, %v1815
      %v1822 = vpack.c.b16 %v1818, %v1817
      %v1828 = vsel %vm1568, %v1801, 0
      %v1831 = vsel %vm1568, %v1802, 0
      %1833 = vmatpush.bf16.msra.mxu0 0
      %1834 = vmatpush.bf16.msra.mxu0 0
      %1835 = vmatpush.bf16.msra.mxu0 0
      %1836 = vmatpush.bf16.msra.mxu0 0
      %1837 = vmatpush.bf16.msra.mxu0 %v1822
      %1838 = vmatpush.bf16.msra.mxu0 %v1821
      %1839 = vmatpush.bf16.msra.mxu0 %v1820
      %1840 = vmatpush.bf16.msra.mxu0 %v1819
      %1841 = vmatmul.bf16.gmra.mxu0 %v1828
      %v1842 = vpop.f32.mrf.mxu0
      %v1843 = vadd.f32 0.0, %v1842
      %v1844 = vpop.f32.mrf.mxu0
      %v1845 = vadd.f32 0.0, %v1844
      %1846 = vmatmul.bf16.gmra.mxu0 %v1831
      %v1847 = vpop.f32.mrf.mxu0
      %v1848 = vadd.f32 0.0, %v1847
      %v1849 = vpop.f32.mrf.mxu0
      %v1850 = vadd.f32 0.0, %v1849
      %1851 = vdwg.mxu0
      %v1856 = vunpack.c.l.b16 %v1749
      %v1857 = vunpack.c.l.b16 %v1750
      %v1858 = vunpack.c.l.b16 %v1751
      %v1859 = vunpack.c.l.b16 %v1752
      %v1860 = vpack.c.b16 %v1857, %v1856
      %v1861 = vpack.c.b16 %v1859, %v1858
      %v1870 = vunpack.c.l.b16 %v1769
      %v1871 = vunpack.c.l.b16 %v1770
      %v1872 = vunpack.c.l.b16 %v1771
      %v1873 = vunpack.c.l.b16 %v1772
      %v1874 = vunpack.c.l.b16 %v1773
      %v1875 = vunpack.c.l.b16 %v1774
      %v1876 = vunpack.c.l.b16 %v1775
      %v1877 = vunpack.c.l.b16 %v1776
      %v1878 = vpack.c.b16 %v1871, %v1870
      %v1879 = vpack.c.b16 %v1873, %v1872
      %v1880 = vpack.c.b16 %v1875, %v1874
      %v1881 = vpack.c.b16 %v1877, %v1876
      %v1887 = vsel %vm1568, %v1860, 0
      %v1890 = vsel %vm1568, %v1861, 0
      %1892 = vmatpush.bf16.msra.mxu0 0
      %1893 = vmatpush.bf16.msra.mxu0 0
      %1894 = vmatpush.bf16.msra.mxu0 0
      %1895 = vmatpush.bf16.msra.mxu0 0
      %1896 = vmatpush.bf16.msra.mxu0 %v1881
      %1897 = vmatpush.bf16.msra.mxu0 %v1880
      %1898 = vmatpush.bf16.msra.mxu0 %v1879
      %1899 = vmatpush.bf16.msra.mxu0 %v1878
      %1900 = vmatmul.bf16.gmra.mxu0 %v1887
      %v1901 = vpop.f32.mrf.mxu0
      %v1902 = vadd.f32 0.0, %v1901
      %v1903 = vpop.f32.mrf.mxu0
      %v1904 = vadd.f32 0.0, %v1903
      %1905 = vmatmul.bf16.gmra.mxu0 %v1890
      %v1906 = vpop.f32.mrf.mxu0
      %v1907 = vadd.f32 0.0, %v1906
      %v1908 = vpop.f32.mrf.mxu0
      %v1909 = vadd.f32 0.0, %v1908
      %1910 = vdwg.mxu0
      %v1915 = vunpack.c.l.b16 %v1753
      %v1916 = vunpack.c.l.b16 %v1754
      %v1917 = vunpack.c.l.b16 %v1755
      %v1918 = vunpack.c.l.b16 %v1756
      %v1919 = vpack.c.b16 %v1916, %v1915
      %v1920 = vpack.c.b16 %v1918, %v1917
      %v1929 = vunpack.c.l.b16 %v1777
      %v1930 = vunpack.c.l.b16 %v1778
      %v1931 = vunpack.c.l.b16 %v1779
      %v1932 = vunpack.c.l.b16 %v1780
      %v1933 = vunpack.c.l.b16 %v1781
      %v1934 = vunpack.c.l.b16 %v1782
      %v1935 = vunpack.c.l.b16 %v1783
      %v1936 = vunpack.c.l.b16 %v1784
      %v1937 = vpack.c.b16 %v1930, %v1929
      %v1938 = vpack.c.b16 %v1932, %v1931
      %v1939 = vpack.c.b16 %v1934, %v1933
      %v1940 = vpack.c.b16 %v1936, %v1935
      %v1946 = vsel %vm1568, %v1919, 0
      %v1949 = vsel %vm1568, %v1920, 0
      %1951 = vmatpush.bf16.msra.mxu0 0
      %1952 = vmatpush.bf16.msra.mxu0 0
      %1953 = vmatpush.bf16.msra.mxu0 0
      %1954 = vmatpush.bf16.msra.mxu0 0
      %1955 = vmatpush.bf16.msra.mxu0 %v1940
      %1956 = vmatpush.bf16.msra.mxu0 %v1939
      %1957 = vmatpush.bf16.msra.mxu0 %v1938
      %1958 = vmatpush.bf16.msra.mxu0 %v1937
      %1959 = vmatmul.bf16.gmra.mxu0 %v1946
      %v1960 = vpop.f32.mrf.mxu0
      %v1961 = vadd.f32 0.0, %v1960
      %v1962 = vpop.f32.mrf.mxu0
      %v1963 = vadd.f32 0.0, %v1962
      %1964 = vmatmul.bf16.gmra.mxu0 %v1949
      %v1965 = vpop.f32.mrf.mxu0
      %v1966 = vadd.f32 0.0, %v1965
      %v1967 = vpop.f32.mrf.mxu0
      %v1968 = vadd.f32 0.0, %v1967
      %1969 = vdwg.mxu0
      %v1974 = vunpack.c.l.b16 %v1757
      %v1975 = vunpack.c.l.b16 %v1758
      %v1976 = vunpack.c.l.b16 %v1759
      %v1977 = vunpack.c.l.b16 %v1760
      %v1978 = vpack.c.b16 %v1975, %v1974
      %v1979 = vpack.c.b16 %v1977, %v1976
      %v1988 = vunpack.c.l.b16 %v1785
      %v1989 = vunpack.c.l.b16 %v1786
      %v1990 = vunpack.c.l.b16 %v1787
      %v1991 = vunpack.c.l.b16 %v1788
      %v1992 = vunpack.c.l.b16 %v1789
      %v1993 = vunpack.c.l.b16 %v1790
      %v1994 = vunpack.c.l.b16 %v1791
      %v1995 = vunpack.c.l.b16 %v1792
      %v1996 = vpack.c.b16 %v1989, %v1988
      %v1997 = vpack.c.b16 %v1991, %v1990
      %v1998 = vpack.c.b16 %v1993, %v1992
      %v1999 = vpack.c.b16 %v1995, %v1994
      %v2005 = vsel %vm1568, %v1978, 0
      %v2008 = vsel %vm1568, %v1979, 0
      %2010 = vmatpush.bf16.msra.mxu0 0
      %2011 = vmatpush.bf16.msra.mxu0 0
      %2012 = vmatpush.bf16.msra.mxu0 0
      %2013 = vmatpush.bf16.msra.mxu0 0
      %2014 = vmatpush.bf16.msra.mxu0 %v1999
      %2015 = vmatpush.bf16.msra.mxu0 %v1998
      %2016 = vmatpush.bf16.msra.mxu0 %v1997
      %2017 = vmatpush.bf16.msra.mxu0 %v1996
      %2018 = vmatmul.bf16.gmra.mxu0 %v2005
      %v2019 = vpop.f32.mrf.mxu0
      %v2020 = vadd.f32 0.0, %v2019
      %v2021 = vpop.f32.mrf.mxu0
      %v2022 = vadd.f32 0.0, %v2021
      %2023 = vmatmul.bf16.gmra.mxu0 %v2008
      %v2024 = vpop.f32.mrf.mxu0
      %v2025 = vadd.f32 0.0, %v2024
      %v2026 = vpop.f32.mrf.mxu0
      %v2027 = vadd.f32 0.0, %v2026
      %2028 = vdwg.mxu0
      %v2029 = vpack.c.bf16 %v1843, %v1843
      %v2030 = vpack.c.bf16 %v1845, %v1845
      %v2031 = vpack.c.bf16 %v1848, %v1848
      %v2032 = vpack.c.bf16 %v1850, %v1850
      %v2033 = vpack.c.bf16 %v1902, %v1902
      %v2034 = vpack.c.bf16 %v1904, %v1904
      %v2035 = vpack.c.bf16 %v1907, %v1907
      %v2036 = vpack.c.bf16 %v1909, %v1909
      %v2037 = vpack.c.bf16 %v1961, %v1961
      %v2038 = vpack.c.bf16 %v1963, %v1963
      %v2039 = vpack.c.bf16 %v1966, %v1966
      %v2040 = vpack.c.bf16 %v1968, %v1968
      %v2041 = vpack.c.bf16 %v2020, %v2020
      %v2042 = vpack.c.bf16 %v2022, %v2022
      %v2043 = vpack.c.bf16 %v2025, %v2025
      %v2044 = vpack.c.bf16 %v2027, %v2027
      %v2049 = vunpack.c.l.b16 %v2029
      %v2050 = vunpack.c.l.b16 %v2030
      %v2051 = vunpack.c.l.b16 %v2031
      %v2052 = vunpack.c.l.b16 %v2032
      %v2053 = vpack.c.b16 %v2050, %v2049
      %v2054 = vpack.c.b16 %v2052, %v2051
      %v2059 = vunpack.c.l.b16 %v2033
      %v2060 = vunpack.c.l.b16 %v2034
      %v2061 = vunpack.c.l.b16 %v2035
      %v2062 = vunpack.c.l.b16 %v2036
      %v2063 = vpack.c.b16 %v2060, %v2059
      %v2064 = vpack.c.b16 %v2062, %v2061
      %2065 = vrot.lane.b32.xlu0 %v2063, 8
      %v2066 = vpop.permute.xlu0 %2065
      %2067 = vrot.lane.b32.xlu0 %v2064, 8
      %v2068 = vpop.permute.xlu0 %2067
      %v2073 = vunpack.c.l.b16 %v2037
      %v2074 = vunpack.c.l.b16 %v2038
      %v2075 = vunpack.c.l.b16 %v2039
      %v2076 = vunpack.c.l.b16 %v2040
      %v2077 = vpack.c.b16 %v2074, %v2073
      %v2078 = vpack.c.b16 %v2076, %v2075
      %2079 = vrot.lane.b32.xlu0 %v2077, 16
      %v2080 = vpop.permute.xlu0 %2079
      %2081 = vrot.lane.b32.xlu0 %v2078, 16
      %v2082 = vpop.permute.xlu0 %2081
      %v2087 = vunpack.c.l.b16 %v2041
      %v2088 = vunpack.c.l.b16 %v2042
      %v2089 = vunpack.c.l.b16 %v2043
      %v2090 = vunpack.c.l.b16 %v2044
      %v2091 = vpack.c.b16 %v2088, %v2087
      %v2092 = vpack.c.b16 %v2090, %v2089
      %2093 = vrot.lane.b32.xlu0 %v2091, 24
      %v2094 = vpop.permute.xlu0 %2093
      %2095 = vrot.lane.b32.xlu0 %v2092, 24
      %v2096 = vpop.permute.xlu0 %2095
      %v2099 = vsel %vm1341, %v2053, %v2066
      %v2102 = vsel %vm1341, %v2054, %v2068
      %vm2103 = vcmask 130048
      %v2105 = vsel %vm2103, %v2099, %v2080
      %v2107 = vsel %vm2103, %v2102, %v2082
      %vm2108 = vcmask 195584
      %v2110 = vsel %vm2108, %v2105, %v2094
      %v2112 = vsel %vm2108, %v2107, %v2096
      %v2113 = vld [vmem:[%s9] sm:$0xf]
      %v2114 = vld [vmem:[%s9 + $0x4] sm:$0xf]
      %v2115 = vld [vmem:[%s9 + $0x8] sm:$0xf]
      %v2116 = vld [vmem:[%s9 + $0xc] sm:$0xf]
      %v2121 = vunpack.c.l.b16 %v2113
      %v2122 = vunpack.c.l.b16 %v2114
      %v2123 = vunpack.c.l.b16 %v2115
      %v2124 = vunpack.c.l.b16 %v2116
      %v2125 = vpack.c.b16 %v2122, %v2121
      %v2126 = vpack.c.b16 %v2124, %v2123
      %v2129 = vsel %vm1225, %v2110, 0
      %v2131 = vsel %vm1225, %v2112, 0
      %2133 = vmatpush.bf16.msra.mxu0 0
      %2134 = vmatpush.bf16.msra.mxu0 0
      %2135 = vmatpush.bf16.msra.mxu0 0
      %2136 = vmatpush.bf16.msra.mxu0 0
      %2137 = vmatpush.bf16.msra.mxu0 0
      %2138 = vmatpush.bf16.msra.mxu0 0
      %2139 = vmatpush.bf16.msra.mxu0 %v2126
      %2140 = vmatpush.bf16.msra.mxu0 %v2125
      %2141 = vmatmul.bf16.gmra.mxu0 %v2129
      %v2142 = vpop.f32.mrf.mxu0
      %v2143 = vadd.f32 0.0, %v2142
      %v2144 = vpop.f32.mrf.mxu0
      %v2145 = vadd.f32 0.0, %v2144
      %2146 = vmatmul.bf16.gmra.mxu0 %v2131
      %v2147 = vpop.f32.mrf.mxu0
      %v2148 = vadd.f32 0.0, %v2147
      %v2149 = vpop.f32.mrf.mxu0
      %v2150 = vadd.f32 0.0, %v2149
      %2151 = vdwg.mxu0
      %v2152 = vadd.f32 %v1183, %v2143
      %v2153 = vadd.f32 %v1184, %v2145
      %v2154 = vadd.f32 %v1185, %v2148
      %v2155 = vadd.f32 %v1186, %v2150
      %v2156 = vld [vmem:[%s10] sm:$0x1]
      %v2158 = vperm.slane %v2156, 0
      %v2160 = vadd.f32 %v2152, %v2158
      %v2161 = vadd.f32 %v2153, %v2158
      %v2162 = vadd.f32 %v2154, %v2158
      %v2163 = vadd.f32 %v2155, %v2158
      %v2164 = vsel %vm1225, %v2160, 0.0
      %2165 = vadd.xlane.f32.xlu0 %v2164
      %v2166 = vpop.xlane.xlu0 %2165
      %v2167 = vsel %vm1225, %v2161, 0.0
      %2168 = vadd.xlane.f32.xlu0 %v2167
      %v2169 = vpop.xlane.xlu0 %2168
      %v2170 = vsel %vm1225, %v2162, 0.0
      %2171 = vadd.xlane.f32.xlu0 %v2170
      %v2172 = vpop.xlane.xlu0 %2171
      %v2173 = vsel %vm1225, %v2163, 0.0
      %2174 = vadd.xlane.f32.xlu0 %v2173
      %v2175 = vpop.xlane.xlu0 %2174
      %v2176 = vrcp.pop 32.0
      %v2177 = vmul.f32 32.0, %v2176
      %v2178 = vsub.f32 1.0, %v2177
      %v2179 = vmul.f32 %v2176, %v2178
      %v2180 = vadd.f32 %v2176, %v2179
      %vm2181 = vweird.f32 %v2176
      %v2182 = vsel %vm2181, %v2176, %v2180
      %v2183 = vmul.f32 %v2166, %v2182
      %v2184 = vmul.f32 %v2169, %v2182
      %v2185 = vmul.f32 %v2172, %v2182
      %v2186 = vmul.f32 %v2175, %v2182
      %v2187 = vsub.f32 %v2160, %v2183
      %v2188 = vsub.f32 %v2161, %v2184
      %v2189 = vsub.f32 %v2162, %v2185
      %v2190 = vsub.f32 %v2163, %v2186
      %v2191 = vmul.f32 %v2187, %v2187
      %v2192 = vmul.f32 %v2188, %v2188
      %v2193 = vmul.f32 %v2189, %v2189
      %v2194 = vmul.f32 %v2190, %v2190
      %v2195 = vsel %vm1225, %v2191, 0.0
      %2196 = vadd.xlane.f32.xlu0 %v2195
      %v2197 = vpop.xlane.xlu0 %2196
      %v2198 = vsel %vm1225, %v2192, 0.0
      %2199 = vadd.xlane.f32.xlu0 %v2198
      %v2200 = vpop.xlane.xlu0 %2199
      %v2201 = vsel %vm1225, %v2193, 0.0
      %2202 = vadd.xlane.f32.xlu0 %v2201
      %v2203 = vpop.xlane.xlu0 %2202
      %v2204 = vsel %vm1225, %v2194, 0.0
      %2205 = vadd.xlane.f32.xlu0 %v2204
      %v2206 = vpop.xlane.xlu0 %2205
      %v2207 = vmul.f32 %v2197, %v2182
      %v2208 = vmul.f32 %v2200, %v2182
      %v2209 = vmul.f32 %v2203, %v2182
      %v2210 = vmul.f32 %v2206, %v2182
      %v2211 = vadd.f32 %v2207, 1e-05
      %v2212 = vadd.f32 %v2208, 1e-05
      %v2213 = vadd.f32 %v2209, 1e-05
      %v2214 = vadd.f32 %v2210, 1e-05
      %v2215 = vrsqrt.pop %v2211
      %v2216 = vmul.f32 %v2215, %v2211
      %v2217 = vmul.f32 %v2216, %v2215
      %v2218 = vmul.f32 0.5, %v2217
      %v2219 = vsub.f32 1.5, %v2218
      %v2220 = vmul.f32 %v2215, %v2219
      %vm2221 = vweird.f32 %v2211
      %vm2222 = vweird.f32 %v2215
      %vm2223 = vmor %vm2221, %vm2222
      %v2224 = vsel %vm2223, %v2215, %v2220
      %v2225 = vrsqrt.pop %v2212
      %v2226 = vmul.f32 %v2225, %v2212
      %v2227 = vmul.f32 %v2226, %v2225
      %v2228 = vmul.f32 0.5, %v2227
      %v2229 = vsub.f32 1.5, %v2228
      %v2230 = vmul.f32 %v2225, %v2229
      %vm2231 = vweird.f32 %v2212
      %vm2232 = vweird.f32 %v2225
      %vm2233 = vmor %vm2231, %vm2232
      %v2234 = vsel %vm2233, %v2225, %v2230
      %v2235 = vrsqrt.pop %v2213
      %v2236 = vmul.f32 %v2235, %v2213
      %v2237 = vmul.f32 %v2236, %v2235
      %v2238 = vmul.f32 0.5, %v2237
      %v2239 = vsub.f32 1.5, %v2238
      %v2240 = vmul.f32 %v2235, %v2239
      %vm2241 = vweird.f32 %v2213
      %vm2242 = vweird.f32 %v2235
      %vm2243 = vmor %vm2241, %vm2242
      %v2244 = vsel %vm2243, %v2235, %v2240
      %v2245 = vrsqrt.pop %v2214
      %v2246 = vmul.f32 %v2245, %v2214
      %v2247 = vmul.f32 %v2246, %v2245
      %v2248 = vmul.f32 0.5, %v2247
      %v2249 = vsub.f32 1.5, %v2248
      %v2250 = vmul.f32 %v2245, %v2249
      %vm2251 = vweird.f32 %v2214
      %vm2252 = vweird.f32 %v2245
      %vm2253 = vmor %vm2251, %vm2252
      %v2254 = vsel %vm2253, %v2245, %v2250
      %v2255 = vmul.f32 %v2187, %v2224
      %v2256 = vmul.f32 %v2188, %v2234
      %v2257 = vmul.f32 %v2189, %v2244
      %v2258 = vmul.f32 %v2190, %v2254
      %v2259 = vld [vmem:[%s11] sm:$0x1]
      %v2261 = vperm.slane %v2259, 0
      %v2263 = vmul.f32 %v2255, %v2261
      %v2264 = vmul.f32 %v2256, %v2261
      %v2265 = vmul.f32 %v2257, %v2261
      %v2266 = vmul.f32 %v2258, %v2261
      %v2267 = vld [vmem:[%s12] sm:$0x1]
      %v2269 = vperm.slane %v2267, 0
      %v2271 = vadd.f32 %v2263, %v2269
      %v2272 = vadd.f32 %v2264, %v2269
      %v2273 = vadd.f32 %v2265, %v2269
      %v2274 = vadd.f32 %v2266, %v2269
      %v2275 = vpack.c.bf16 %v2272, %v2271
      %v2276 = vpack.c.bf16 %v2274, %v2273
      %v2277 = vld [vmem:[%s13] sm:$0xf]
      %v2278 = vld [vmem:[%s13 + $0x4] sm:$0xf]
      %v2279 = vld [vmem:[%s13 + $0x8] sm:$0xf]
      %v2280 = vld [vmem:[%s13 + $0xc] sm:$0xf]
      %v2281 = vld [vmem:[%s14] sm:$0x1]
      %v2283 = vperm.slane %v2281, 0
      %v2289 = vunpack.c.l.b16 %v2277
      %v2290 = vunpack.c.l.b16 %v2278
      %v2291 = vunpack.c.l.b16 %v2279
      %v2292 = vunpack.c.l.b16 %v2280
      %v2293 = vpack.c.b16 %v2290, %v2289
      %v2294 = vpack.c.b16 %v2292, %v2291
      %v2298 = vsel %vm1225, %v2275, 0
      %v2301 = vsel %vm1225, %v2276, 0
      %2303 = vmatpush.bf16.msra.mxu0 0
      %2304 = vmatpush.bf16.msra.mxu0 0
      %2305 = vmatpush.bf16.msra.mxu0 0
      %2306 = vmatpush.bf16.msra.mxu0 0
      %2307 = vmatpush.bf16.msra.mxu0 0
      %2308 = vmatpush.bf16.msra.mxu0 0
      %2309 = vmatpush.bf16.msra.mxu0 %v2294
      %2310 = vmatpush.bf16.msra.mxu0 %v2293
      %2311 = vmatmul.bf16.gmra.mxu0 %v2298
      %v2312 = vpop.f32.mrf.mxu0
      %v2313 = vadd.f32 %v2283, %v2312
      %v2314 = vpop.f32.mrf.mxu0
      %v2315 = vadd.f32 %v2283, %v2314
      %2316 = vmatmul.bf16.gmra.mxu0 %v2301
      %v2317 = vpop.f32.mrf.mxu0
      %v2318 = vadd.f32 %v2283, %v2317
      %v2319 = vpop.f32.mrf.mxu0
      %v2320 = vadd.f32 %v2283, %v2319
      %2321 = vdwg.mxu0
      %v2322 = vmul.f32 %v2313, 0.5
      %v2323 = vmul.f32 %v2315, 0.5
      %v2324 = vmul.f32 %v2318, 0.5
      %v2325 = vmul.f32 %v2320, 0.5
      %v2326 = vmul.f32 %v2313, 0.70710677
      %v2327 = vmul.f32 %v2315, 0.70710677
      %v2328 = vmul.f32 %v2318, 0.70710677
      %v2329 = vmul.f32 %v2320, 0.70710677
      %v2330 = vmul.f32 %v2326, %v2326
      %v2331 = vmin.f32 16.0, %v2330
      %v2332 = vmul.f32 %v2331, 2.1237322e-06
      %v2333 = vadd.f32 %v2332, 0.00028619796
      %v2334 = vmul.f32 %v2331, %v2333
      %v2335 = vadd.f32 %v2334, 0.0036580483
      %v2336 = vmul.f32 %v2331, %v2335
      %v2337 = vadd.f32 %v2336, 0.05243302
      %v2338 = vmul.f32 %v2331, %v2337
      %v2339 = vadd.f32 %v2338, 0.18741608
      %v2340 = vmul.f32 %v2331, %v2339
      %v2341 = vadd.f32 %v2340, 1.1283791
      %v2342 = vmul.f32 %v2326, %v2341
      %v2343 = vmul.f32 %v2331, 3.8918573e-05
      %v2344 = vadd.f32 %v2343, 0.001143296
      %v2345 = vmul.f32 %v2331, %v2344
      %v2346 = vadd.f32 %v2345, 0.014752088
      %v2347 = vmul.f32 %v2331, %v2346
      %v2348 = vadd.f32 %v2347, 0.112945676
      %v2349 = vmul.f32 %v2331, %v2348
      %v2350 = vadd.f32 %v2349, 0.4994258
      %v2351 = vmul.f32 %v2331, %v2350
      %v2352 = vadd.f32 %v2351, 1.0
      %v2353 = vrcp.pop %v2352
      %v2354 = vmul.f32 %v2352, %v2353
      %v2355 = vsub.f32 1.0, %v2354
      %v2356 = vmul.f32 %v2353, %v2355
      %v2357 = vadd.f32 %v2353, %v2356
      %vm2358 = vweird.f32 %v2352
      %vm2359 = vweird.f32 %v2353
      %vm2360 = vmor %vm2358, %vm2359
      %v2361 = vsel %vm2360, %v2353, %v2357
      %v2362 = vand.u32 2147483647, %v2352
      %vm2363 = vcmp.eq.f32.partialorder %v2362, 8.507059e+37
      %v2364 = vand.u32 %v2352, 2147483648
      %v2365 = vor.u32 1.1754944e-38, %v2364
      %v2366 = vsel %vm2363, %v2365, %v2361
      %v2367 = vmul.f32 %v2342, %v2366
      %v2368 = vmin.f32 %v2367, 1.0
      %v2369 = vmax.f32 %v2368, -1.0
      %v2370 = vmul.f32 %v2327, %v2327
      %v2371 = vmin.f32 16.0, %v2370
      %v2372 = vmul.f32 %v2371, 2.1237322e-06
      %v2373 = vadd.f32 %v2372, 0.00028619796
      %v2374 = vmul.f32 %v2371, %v2373
      %v2375 = vadd.f32 %v2374, 0.0036580483
      %v2376 = vmul.f32 %v2371, %v2375
      %v2377 = vadd.f32 %v2376, 0.05243302
      %v2378 = vmul.f32 %v2371, %v2377
      %v2379 = vadd.f32 %v2378, 0.18741608
      %v2380 = vmul.f32 %v2371, %v2379
      %v2381 = vadd.f32 %v2380, 1.1283791
      %v2382 = vmul.f32 %v2327, %v2381
      %v2383 = vmul.f32 %v2371, 3.8918573e-05
      %v2384 = vadd.f32 %v2383, 0.001143296
      %v2385 = vmul.f32 %v2371, %v2384
      %v2386 = vadd.f32 %v2385, 0.014752088
      %v2387 = vmul.f32 %v2371, %v2386
      %v2388 = vadd.f32 %v2387, 0.112945676
      %v2389 = vmul.f32 %v2371, %v2388
      %v2390 = vadd.f32 %v2389, 0.4994258
      %v2391 = vmul.f32 %v2371, %v2390
      %v2392 = vadd.f32 %v2391, 1.0
      %v2393 = vrcp.pop %v2392
      %v2394 = vmul.f32 %v2392, %v2393
      %v2395 = vsub.f32 1.0, %v2394
      %v2396 = vmul.f32 %v2393, %v2395
      %v2397 = vadd.f32 %v2393, %v2396
      %vm2398 = vweird.f32 %v2392
      %vm2399 = vweird.f32 %v2393
      %vm2400 = vmor %vm2398, %vm2399
      %v2401 = vsel %vm2400, %v2393, %v2397
      %v2402 = vand.u32 2147483647, %v2392
      %vm2403 = vcmp.eq.f32.partialorder %v2402, 8.507059e+37
      %v2404 = vand.u32 %v2392, 2147483648
      %v2405 = vor.u32 1.1754944e-38, %v2404
      %v2406 = vsel %vm2403, %v2405, %v2401
      %v2407 = vmul.f32 %v2382, %v2406
      %v2408 = vmin.f32 %v2407, 1.0
      %v2409 = vmax.f32 %v2408, -1.0
      %v2410 = vmul.f32 %v2328, %v2328
      %v2411 = vmin.f32 16.0, %v2410
      %v2412 = vmul.f32 %v2411, 2.1237322e-06
      %v2413 = vadd.f32 %v2412, 0.00028619796
      %v2414 = vmul.f32 %v2411, %v2413
      %v2415 = vadd.f32 %v2414, 0.0036580483
      %v2416 = vmul.f32 %v2411, %v2415
      %v2417 = vadd.f32 %v2416, 0.05243302
      %v2418 = vmul.f32 %v2411, %v2417
      %v2419 = vadd.f32 %v2418, 0.18741608
      %v2420 = vmul.f32 %v2411, %v2419
      %v2421 = vadd.f32 %v2420, 1.1283791
      %v2422 = vmul.f32 %v2328, %v2421
      %v2423 = vmul.f32 %v2411, 3.8918573e-05
      %v2424 = vadd.f32 %v2423, 0.001143296
      %v2425 = vmul.f32 %v2411, %v2424
      %v2426 = vadd.f32 %v2425, 0.014752088
      %v2427 = vmul.f32 %v2411, %v2426
      %v2428 = vadd.f32 %v2427, 0.112945676
      %v2429 = vmul.f32 %v2411, %v2428
      %v2430 = vadd.f32 %v2429, 0.4994258
      %v2431 = vmul.f32 %v2411, %v2430
      %v2432 = vadd.f32 %v2431, 1.0
      %v2433 = vrcp.pop %v2432
      %v2434 = vmul.f32 %v2432, %v2433
      %v2435 = vsub.f32 1.0, %v2434
      %v2436 = vmul.f32 %v2433, %v2435
      %v2437 = vadd.f32 %v2433, %v2436
      %vm2438 = vweird.f32 %v2432
      %vm2439 = vweird.f32 %v2433
      %vm2440 = vmor %vm2438, %vm2439
      %v2441 = vsel %vm2440, %v2433, %v2437
      %v2442 = vand.u32 2147483647, %v2432
      %vm2443 = vcmp.eq.f32.partialorder %v2442, 8.507059e+37
      %v2444 = vand.u32 %v2432, 2147483648
      %v2445 = vor.u32 1.1754944e-38, %v2444
      %v2446 = vsel %vm2443, %v2445, %v2441
      %v2447 = vmul.f32 %v2422, %v2446
      %v2448 = vmin.f32 %v2447, 1.0
      %v2449 = vmax.f32 %v2448, -1.0
      %v2450 = vmul.f32 %v2329, %v2329
      %v2451 = vmin.f32 16.0, %v2450
      %v2452 = vmul.f32 %v2451, 2.1237322e-06
      %v2453 = vadd.f32 %v2452, 0.00028619796
      %v2454 = vmul.f32 %v2451, %v2453
      %v2455 = vadd.f32 %v2454, 0.0036580483
      %v2456 = vmul.f32 %v2451, %v2455
      %v2457 = vadd.f32 %v2456, 0.05243302
      %v2458 = vmul.f32 %v2451, %v2457
      %v2459 = vadd.f32 %v2458, 0.18741608
      %v2460 = vmul.f32 %v2451, %v2459
      %v2461 = vadd.f32 %v2460, 1.1283791
      %v2462 = vmul.f32 %v2329, %v2461
      %v2463 = vmul.f32 %v2451, 3.8918573e-05
      %v2464 = vadd.f32 %v2463, 0.001143296
      %v2465 = vmul.f32 %v2451, %v2464
      %v2466 = vadd.f32 %v2465, 0.014752088
      %v2467 = vmul.f32 %v2451, %v2466
      %v2468 = vadd.f32 %v2467, 0.112945676
      %v2469 = vmul.f32 %v2451, %v2468
      %v2470 = vadd.f32 %v2469, 0.4994258
      %v2471 = vmul.f32 %v2451, %v2470
      %v2472 = vadd.f32 %v2471, 1.0
      %v2473 = vrcp.pop %v2472
      %v2474 = vmul.f32 %v2472, %v2473
      %v2475 = vsub.f32 1.0, %v2474
      %v2476 = vmul.f32 %v2473, %v2475
      %v2477 = vadd.f32 %v2473, %v2476
      %vm2478 = vweird.f32 %v2472
      %vm2479 = vweird.f32 %v2473
      %vm2480 = vmor %vm2478, %vm2479
      %v2481 = vsel %vm2480, %v2473, %v2477
      %v2482 = vand.u32 2147483647, %v2472
      %vm2483 = vcmp.eq.f32.partialorder %v2482, 8.507059e+37
      %v2484 = vand.u32 %v2472, 2147483648
      %v2485 = vor.u32 1.1754944e-38, %v2484
      %v2486 = vsel %vm2483, %v2485, %v2481
      %v2487 = vmul.f32 %v2462, %v2486
      %v2488 = vmin.f32 %v2487, 1.0
      %v2489 = vmax.f32 %v2488, -1.0
      %v2490 = vadd.f32 %v2369, 1.0
      %v2491 = vadd.f32 %v2409, 1.0
      %v2492 = vadd.f32 %v2449, 1.0
      %v2493 = vadd.f32 %v2489, 1.0
      %v2494 = vmul.f32 %v2322, %v2490
      %v2495 = vmul.f32 %v2323, %v2491
      %v2496 = vmul.f32 %v2324, %v2492
      %v2497 = vmul.f32 %v2325, %v2493
      %v2498 = vpack.c.bf16 %v2495, %v2494
      %v2499 = vpack.c.bf16 %v2497, %v2496
      %v2500 = vld [vmem:[%s15] sm:$0xf]
      %v2501 = vld [vmem:[%s15 + $0x4] sm:$0xf]
      %v2502 = vld [vmem:[%s15 + $0x8] sm:$0xf]
      %v2503 = vld [vmem:[%s15 + $0xc] sm:$0xf]
      %v2504 = vld [vmem:[%s15 + $0x10] sm:$0xf]
      %v2505 = vld [vmem:[%s15 + $0x14] sm:$0xf]
      %v2506 = vld [vmem:[%s15 + $0x18] sm:$0xf]
      %v2507 = vld [vmem:[%s15 + $0x1c] sm:$0xf]
      %v2508 = vld [vmem:[%s15 + $0x20] sm:$0xf]
      %v2509 = vld [vmem:[%s15 + $0x24] sm:$0xf]
      %v2510 = vld [vmem:[%s15 + $0x28] sm:$0xf]
      %v2511 = vld [vmem:[%s15 + $0x2c] sm:$0xf]
      %v2512 = vld [vmem:[%s15 + $0x30] sm:$0xf]
      %v2513 = vld [vmem:[%s15 + $0x34] sm:$0xf]
      %v2514 = vld [vmem:[%s15 + $0x38] sm:$0xf]
      %v2515 = vld [vmem:[%s15 + $0x3c] sm:$0xf]
      %v2532 = vunpack.c.l.b16 %v2500
      %v2533 = vunpack.c.l.b16 %v2501
      %v2534 = vunpack.c.l.b16 %v2502
      %v2535 = vunpack.c.l.b16 %v2503
      %v2536 = vunpack.c.l.b16 %v2504
      %v2537 = vunpack.c.l.b16 %v2505
      %v2538 = vunpack.c.l.b16 %v2506
      %v2539 = vunpack.c.l.b16 %v2507
      %v2540 = vunpack.c.l.b16 %v2508
      %v2541 = vunpack.c.l.b16 %v2509
      %v2542 = vunpack.c.l.b16 %v2510
      %v2543 = vunpack.c.l.b16 %v2511
      %v2544 = vunpack.c.l.b16 %v2512
      %v2545 = vunpack.c.l.b16 %v2513
      %v2546 = vunpack.c.l.b16 %v2514
      %v2547 = vunpack.c.l.b16 %v2515
      %v2548 = vpack.c.b16 %v2533, %v2532
      %v2549 = vpack.c.b16 %v2535, %v2534
      %v2550 = vpack.c.b16 %v2537, %v2536
      %v2551 = vpack.c.b16 %v2539, %v2538
      %v2552 = vpack.c.b16 %v2541, %v2540
      %v2553 = vpack.c.b16 %v2543, %v2542
      %v2554 = vpack.c.b16 %v2545, %v2544
      %v2555 = vpack.c.b16 %v2547, %v2546
      %2564 = vmatpush.bf16.msra.mxu0 %v2555
      %2565 = vmatpush.bf16.msra.mxu0 %v2554
      %2566 = vmatpush.bf16.msra.mxu0 %v2553
      %2567 = vmatpush.bf16.msra.mxu0 %v2552
      %2568 = vmatpush.bf16.msra.mxu0 %v2551
      %2569 = vmatpush.bf16.msra.mxu0 %v2550
      %2570 = vmatpush.bf16.msra.mxu0 %v2549
      %2571 = vmatpush.bf16.msra.mxu0 %v2548
      %2572 = vmatmul.bf16.gmra.mxu0 %v2498
      %v2573 = vpop.f32.mrf.mxu0
      %v2574 = vadd.f32 0.0, %v2573
      %v2575 = vpop.f32.mrf.mxu0
      %v2576 = vadd.f32 0.0, %v2575
      %2577 = vmatmul.bf16.gmra.mxu0 %v2499
      %v2578 = vpop.f32.mrf.mxu0
      %v2579 = vadd.f32 0.0, %v2578
      %v2580 = vpop.f32.mrf.mxu0
      %v2581 = vadd.f32 0.0, %v2580
      %2582 = vdwg.mxu0
      %v2583 = vadd.f32 %v2160, %v2574
      %v2584 = vadd.f32 %v2161, %v2576
      %v2585 = vadd.f32 %v2162, %v2579
      %v2586 = vadd.f32 %v2163, %v2581
      %v2587 = vld [vmem:[%s16] sm:$0x1]
      %v2589 = vperm.slane %v2587, 0
      %v2591 = vadd.f32 %v2583, %v2589
      %v2592 = vadd.f32 %v2584, %v2589
      %v2593 = vadd.f32 %v2585, %v2589
      %v2594 = vadd.f32 %v2586, %v2589
      %2595 = vst.msk [vmem:[%s570] sm:$0xff] %vm1225, %v2591
      %2596 = vst.msk [vmem:[%s570 + $0x8] sm:$0xff] %vm1225, %v2592
      %2597 = vst.msk [vmem:[%s570 + $0x10] sm:$0xff] %vm1225, %v2593
      %2598 = vst.msk [vmem:[%s570 + $0x18] sm:$0xff] %vm1225, %v2594
      %s2599 = smul.u32 4, %s33
      %p2600 = scmp.lt.s32.totalorder %s32, 1
      %s2601 = scalar_select %p2600, %s32, 1
      %p2602 = scmp.lt.s32.totalorder %s2599, 7
      %s2603 = scalar_select %p2602, %s2599, 7
      %s2604 = smul.addr %s2601, 8
      %s2605 = sadd.s32 %s2603, %s2604
      %s2606 = smul.addr %s2605, 8
      %s2607 = scalar_lea.vmem %s17, %s2606
      // Predicated region
      $region93: #{lit_layer_forward.2} parent=87 // pred_check
        %p2608 = pneg %p422
      $region94: #{lit_layer_forward.2} parent=87 // pred_check_branch
        %2610 = sbr.rel (%p2608) target = $region96
      $region95: #{lit_layer_forward.2} parent=87 // pred_region
        %s2611 = smul.u32 4, %s33
      $region96: #{lit_layer_forward.2} parent=87 // pred_fallthru
        _
    $region88: #{lit_layer_forward.2} parent=5 // pred_fallthru
      _
    %p2612 = scmp.le.s32.totalorder 2, %s23
    // Predicated region
    $region97: #{lit_layer_forward.2} parent=5 // pred_check
      %p2613 = pneg %p2612
    $region98: #{lit_layer_forward.2} parent=5 // pred_check_branch
      %2615 = sbr.rel (%p2613) target = $region100
    $region99: #{lit_layer_forward.2} parent=5 // pred_region
      %s2616 = ssub.s32 %s23, 2
      // Predicated region
      $region101: #{lit_layer_forward.2} parent=99 // pred_check
        %p2617 = pneg %p428
      $region102: #{lit_layer_forward.2} parent=99 // pred_check_branch
        %2619 = sbr.rel (%p2617) target = $region104
      $region103: #{lit_layer_forward.2} parent=99 // pred_region
        %s2620 = smul.u32 4, %s35
        %p2621 = scmp.lt.s32.totalorder %s34, 1
        %s2622 = scalar_select %p2621, %s34, 1
        %p2623 = scmp.lt.s32.totalorder %s2620, 7
        %s2624 = scalar_select %p2623, %s2620, 7
        %s2625 = smul.addr %s2622, 8
        %s2626 = sadd.s32 %s2624, %s2625
        %s2627 = smul.addr %s2626, 8
        %s2628 = scalar_lea.vmem %s17, %s2627
      $region104: #{lit_layer_forward.2} parent=99 // pred_fallthru
        _
    $region100: #{lit_layer_forward.2} parent=5 // pred_fallthru
      _
  $region6: #{lit_layer_forward.2} parent=0 // loop_footer
    %s27 = sadd.s32 1, %s23
  $region7: #{lit_layer_forward.2} parent=0 // loop_footer_branch
    %22 = sbr.rel target = $region3
  $region8: #{lit_layer_forward.2} parent=0 // loop_exit
    _

</llo_original>
